<compile_context>
chip_gen: v7x
topology: tpu7x:2x2x1
jax: 0.10.0
libtpu: 0.0.40
codegen_flags: <defaults>
</compile_context>

<pallas_src>
import math

import jax
import jax.numpy as jnp
from jax.experimental import pallas as pl
from jax.experimental.pallas import tpu as pltpu


def _round_up(x, m):
    return (x + m - 1) // m * m


def _gelu_tanh(x):
    # tanh-approximate GELU: tanh lowers to the EUP (separate VLIW slot), so the
    # activation is essentially free while the MXU / DMA are busy.
    c = math.sqrt(2.0 / math.pi)
    return 0.5 * x * (1.0 + jnp.tanh(c * (x + 0.044715 * x * x * x)))


def _l2_normalize(x):
    # F.normalize(x, dim=-1, p=2, eps=1e-12) == x * rsqrt(max(sum(x^2), eps^2))
    sumsq = jnp.sum(x * x, axis=-1, keepdims=True)
    return x * jax.lax.rsqrt(jnp.maximum(sumsq, 1e-24))


# ---------------------------------------------------------------------------
# Kernel: one batch tile per grid step; weights stay VMEM-resident across steps.
# ---------------------------------------------------------------------------
def gcd_head_kernel(x_ref, w1_ref, b1_ref, w2_ref, b2_ref, w3_ref, b3_ref,
                    proto_ref, proj_ref, logits_ref):
    x = x_ref[...]                                              # (TB, D) f32

    # MLPHead: bf16 matmul inputs, f32 accumulation + f32 elementwise.
    h = jnp.dot(x.astype(jnp.bfloat16), w1_ref[...],
                preferred_element_type=jnp.float32) + b1_ref[...]
    h = _gelu_tanh(h)
    h = jnp.dot(h.astype(jnp.bfloat16), w2_ref[...],
                preferred_element_type=jnp.float32) + b2_ref[...]
    h = _gelu_tanh(h)
    p = jnp.dot(h.astype(jnp.bfloat16), w3_ref[...],
                preferred_element_type=jnp.float32) + b3_ref[...]

    # feature_proj = normalize(head(x))
    proj_ref[...] = _l2_normalize(p)

    # logits = Prototypes(normalize(x)); prototype rows are unit-norm (g = 1)
    xn = _l2_normalize(x).astype(jnp.bfloat16)
    logits_ref[...] = jnp.dot(xn, proto_ref[...],
                              preferred_element_type=jnp.float32)


# ---------------------------------------------------------------------------
# Wrapper: padding, dtype casting, BlockSpecs / grid.
# ---------------------------------------------------------------------------
def gcd_model_forward(feature_backbone, params, *, block_b=128):
    """Returns (feature_proj, logits) -- matches GCDModel.forward after backbone."""
    w1, b1, w2, b2, w3, b3, proto_w = params
    B, D = feature_backbone.shape
    H = w1.shape[1]
    O = w3.shape[1]
    C = proto_w.shape[1]

    # Lane-dense output dims (avoid masked vst + idle MXU columns).
    Op = _round_up(O, 128)
    Cp = _round_up(C, 128)

    # Batch tile: multiple of 8 sublanes; pad the batch to a whole grid.
    TB = _round_up(min(block_b, _round_up(B, 8)), 8)
    Bp = _round_up(B, TB)

    x = feature_backbone.astype(jnp.float32)
    if Bp != B:
        x = jnp.pad(x, ((0, Bp - B), (0, 0)))

    # bf16 weights (halve HBM bytes + VMEM; native MXU path). Biases stay f32.
    w1b = w1.astype(jnp.bfloat16)
    w2b = w2.astype(jnp.bfloat16)
    w3b = jnp.pad(w3, ((0, 0), (0, Op - O))).astype(jnp.bfloat16)
    protob = jnp.pad(proto_w, ((0, 0), (0, Cp - C))).astype(jnp.bfloat16)
    b1f = b1.reshape(1, H).astype(jnp.float32)
    b2f = b2.reshape(1, H).astype(jnp.float32)
    b3f = jnp.pad(b3.reshape(1, O), ((0, 0), (0, Op - O))).astype(jnp.float32)

    n_blocks = Bp // TB

    def resident(shape):
        # Constant block index -> the array stays VMEM-resident across all grid
        # steps (DMA'd once, no re-fetch per batch tile).
        return pl.BlockSpec(shape, lambda i: (0,) * len(shape))

    proj_p, logits_p = pl.pallas_call(
        gcd_head_kernel,
        out_shape=(jax.ShapeDtypeStruct((Bp, Op), jnp.float32),
                   jax.ShapeDtypeStruct((Bp, Cp), jnp.float32)),
        grid=(n_blocks,),
        in_specs=[
            pl.BlockSpec((TB, D), lambda i: (i, 0)),     # x: batch-tiled
            resident((D, H)), resident((1, H)),          # fc1
            resident((H, H)), resident((1, H)),          # fc2
            resident((H, Op)), resident((1, Op)),        # fc3
            resident((D, Cp)),                           # prototypes
        ],
        out_specs=(pl.BlockSpec((TB, Op), lambda i: (i, 0)),
                   pl.BlockSpec((TB, Cp), lambda i: (i, 0))),
        compiler_params=pltpu.CompilerParams(
            dimension_semantics=("parallel",),           # megacore on v7x
            vmem_limit_bytes=64 * 1024 * 1024,
        ),
    )(x, w1b, b1f, w2b, b2f, w3b, b3f, protob)

    return proj_p[:B, :O], logits_p[:B, :C]


# ---------------------------------------------------------------------------
# Deterministic parameter construction (mirrors MLPHead._init_weights and
# Prototypes.normalize_prototypes with weight_g == 1).
# ---------------------------------------------------------------------------
def init_params(key, in_features, hidden_features, out_features, num_classes):
    k1, k2, k3, k4 = jax.random.split(key, 4)

    def trunc_normal(k, shape, std=0.02):
        # torch.nn.init.trunc_normal_(std=0.02, a=-2, b=2) truncates at +/-2
        # *absolute* (~ +/-100 sigma) -> effectively an ordinary normal draw.
        return std * jax.random.normal(k, shape, jnp.float32)

    # Linear weights stored transposed as (in, out) for row-major MXU matmuls.
    w1 = trunc_normal(k1, (in_features, hidden_features))
    b1 = jnp.zeros((1, hidden_features), jnp.float32)
    w2 = trunc_normal(k2, (hidden_features, hidden_features))
    b2 = jnp.zeros((1, hidden_features), jnp.float32)
    w3 = trunc_normal(k3, (hidden_features, out_features))
    b3 = jnp.zeros((1, out_features), jnp.float32)

    # Prototypes: nn.Linear(in, C, bias=False) weight (C, D), weight_norm g = 1
    # -> each row unit-normalized; stored transposed as (D, C).
    proto_v = jax.random.normal(k4, (num_classes, in_features), jnp.float32)
    proto_v = proto_v * jax.lax.rsqrt(
        jnp.maximum(jnp.sum(proto_v * proto_v, axis=-1, keepdims=True), 1e-24))
    proto_w = proto_v.T

    return (w1, b1, w2, b2, w3, b3, proto_w)


# ---------------------------------------------------------------------------
# Pure-JAX f32 reference (exact-erf GELU) for a sanity check.
# ---------------------------------------------------------------------------
def reference_forward(x, params):
    w1, b1, w2, b2, w3, b3, proto_w = params
    h = jax.nn.gelu(x @ w1 + b1, approximate=False)
    h = jax.nn.gelu(h @ w2 + b2, approximate=False)
    p = h @ w3 + b3
    proj = p / jnp.maximum(jnp.linalg.norm(p, axis=-1, keepdims=True), 1e-12)
    xn = x / jnp.maximum(jnp.linalg.norm(x, axis=-1, keepdims=True), 1e-12)
    return proj, xn @ proto_w


if __name__ == "__main__":
    # Small shapes consistent with the module structure
    # (real model: in=768, hidden=2048, out=256, C=num_classes).
    B, IN_FEATURES, HIDDEN, OUT, NUM_CLASSES = 40, 256, 512, 256, 16

    key = jax.random.PRNGKey(0)
    k_x, k_p = jax.random.split(key)
    feature_backbone = jax.random.normal(k_x, (B, IN_FEATURES), jnp.float32)
    params = init_params(k_p, IN_FEATURES, HIDDEN, OUT, NUM_CLASSES)

    # block_b=16 so the demo exercises the batch grid + batch padding.
    feature_proj, logits = gcd_model_forward(feature_backbone, params, block_b=16)
    jax.block_until_ready((feature_proj, logits))

    ref_proj, ref_logits = reference_forward(feature_backbone, params)
    assert feature_proj.shape == (B, OUT) and logits.shape == (B, NUM_CLASSES)
    # bf16 matmul inputs + tanh-GELU => looser tolerance than an all-f32 kernel.
    assert float(jnp.max(jnp.abs(feature_proj - ref_proj))) < 3e-2
    assert float(jnp.max(jnp.abs(logits - ref_logits))) < 3e-2

    print("KERNEL_OK")
</pallas_src>

<mosaic_0001>
module attributes {stable_mosaic.version = 11 : i64} {
  func.func @gcd_head_kernel(%arg0: i32, %arg1: memref<16x256xf32, #tpu.memory_space<vmem>>, %arg2: memref<256x512xbf16, #tpu.memory_space<vmem>>, %arg3: memref<1x512xf32, #tpu.memory_space<vmem>>, %arg4: memref<512x512xbf16, #tpu.memory_space<vmem>>, %arg5: memref<1x512xf32, #tpu.memory_space<vmem>>, %arg6: memref<512x256xbf16, #tpu.memory_space<vmem>>, %arg7: memref<1x256xf32, #tpu.memory_space<vmem>>, %arg8: memref<256x128xbf16, #tpu.memory_space<vmem>>, %arg9: memref<16x256xf32, #tpu.memory_space<vmem>>, %arg10: memref<16x128xf32, #tpu.memory_space<vmem>>) attributes {dimension_semantics = [#tpu.dimension_semantics<parallel>], iteration_bounds = array<i64: 3>, scalar_prefetch = 0 : i64, scratch_operands = 0 : i64, tpu.core_type = #tpu.core_type<tc>, window_params = [{transform_indices = @transform_0, window_bounds = array<i64: 16, 256>}, {pipeline_mode = #tpu.pipeline_mode<synchronous>, transform_indices = @transform_1, window_bounds = array<i64: 256, 512>}, {pipeline_mode = #tpu.pipeline_mode<synchronous>, transform_indices = @transform_2, window_bounds = array<i64: 1, 512>}, {pipeline_mode = #tpu.pipeline_mode<synchronous>, transform_indices = @transform_3, window_bounds = array<i64: 512, 512>}, {pipeline_mode = #tpu.pipeline_mode<synchronous>, transform_indices = @transform_4, window_bounds = array<i64: 1, 512>}, {pipeline_mode = #tpu.pipeline_mode<synchronous>, transform_indices = @transform_5, window_bounds = array<i64: 512, 256>}, {pipeline_mode = #tpu.pipeline_mode<synchronous>, transform_indices = @transform_6, window_bounds = array<i64: 1, 256>}, {pipeline_mode = #tpu.pipeline_mode<synchronous>, transform_indices = @transform_7, window_bounds = array<i64: 256, 128>}, {transform_indices = @transform_8, window_bounds = array<i64: 16, 256>}, {transform_indices = @transform_9, window_bounds = array<i64: 16, 128>}]} {
    %c0 = arith.constant 0 : index
    %c0_0 = arith.constant 0 : index
    %0 = vector.load %arg1[%c0, %c0_0] : memref<16x256xf32, #tpu.memory_space<vmem>>, vector<16x256xf32>
    %1 = arith.truncf %0 : vector<16x256xf32> to vector<16x256xbf16>
    %c0_1 = arith.constant 0 : index
    %c0_2 = arith.constant 0 : index
    %2 = vector.load %arg2[%c0_1, %c0_2] : memref<256x512xbf16, #tpu.memory_space<vmem>>, vector<256x512xbf16>
    %cst = arith.constant dense<0.000000e+00> : vector<16x512xf32>
    %3 = tpu.matmul %1, %2, %cst {dimension_numbers = #tpu.dot_dimension_numbers<[1], [0], [0], [1], [0, 0, 1, 1], [], []>} : vector<16x256xbf16>, vector<256x512xbf16>, vector<16x512xf32> -> vector<16x512xf32>
    %c0_3 = arith.constant 0 : index
    %c0_4 = arith.constant 0 : index
    %4 = vector.load %arg3[%c0_3, %c0_4] : memref<1x512xf32, #tpu.memory_space<vmem>>, vector<1x512xf32>
    %5 = vector.broadcast %4 : vector<1x512xf32> to vector<16x512xf32>
    %6 = arith.addf %3, %5 : vector<16x512xf32>
    %cst_5 = arith.constant 5.000000e-01 : f32
    %7 = vector.broadcast %cst_5 : f32 to vector<16x512xf32>
    %8 = arith.mulf %7, %6 : vector<16x512xf32>
    %cst_6 = arith.constant 4.471500e-02 : f32
    %9 = vector.broadcast %cst_6 : f32 to vector<16x512xf32>
    %10 = arith.mulf %9, %6 : vector<16x512xf32>
    %11 = arith.mulf %10, %6 : vector<16x512xf32>
    %12 = arith.mulf %11, %6 : vector<16x512xf32>
    %13 = arith.addf %6, %12 : vector<16x512xf32>
    %cst_7 = arith.constant 0.797884583 : f32
    %14 = vector.broadcast %cst_7 : f32 to vector<16x512xf32>
    %15 = arith.mulf %14, %13 : vector<16x512xf32>
    %16 = math.tanh %15 : vector<16x512xf32>
    %cst_8 = arith.constant 1.000000e+00 : f32
    %17 = vector.broadcast %cst_8 : f32 to vector<16x512xf32>
    %18 = arith.addf %17, %16 : vector<16x512xf32>
    %19 = arith.mulf %8, %18 : vector<16x512xf32>
    %20 = arith.truncf %19 : vector<16x512xf32> to vector<16x512xbf16>
    %c0_9 = arith.constant 0 : index
    %c0_10 = arith.constant 0 : index
    %21 = vector.load %arg4[%c0_9, %c0_10] : memref<512x512xbf16, #tpu.memory_space<vmem>>, vector<512x512xbf16>
    %cst_11 = arith.constant dense<0.000000e+00> : vector<16x512xf32>
    %22 = tpu.matmul %20, %21, %cst_11 {dimension_numbers = #tpu.dot_dimension_numbers<[1], [0], [0], [1], [0, 0, 1, 1], [], []>} : vector<16x512xbf16>, vector<512x512xbf16>, vector<16x512xf32> -> vector<16x512xf32>
    %c0_12 = arith.constant 0 : index
    %c0_13 = arith.constant 0 : index
    %23 = vector.load %arg5[%c0_12, %c0_13] : memref<1x512xf32, #tpu.memory_space<vmem>>, vector<1x512xf32>
    %24 = vector.broadcast %23 : vector<1x512xf32> to vector<16x512xf32>
    %25 = arith.addf %22, %24 : vector<16x512xf32>
    %cst_14 = arith.constant 5.000000e-01 : f32
    %26 = vector.broadcast %cst_14 : f32 to vector<16x512xf32>
    %27 = arith.mulf %26, %25 : vector<16x512xf32>
    %cst_15 = arith.constant 4.471500e-02 : f32
    %28 = vector.broadcast %cst_15 : f32 to vector<16x512xf32>
    %29 = arith.mulf %28, %25 : vector<16x512xf32>
    %30 = arith.mulf %29, %25 : vector<16x512xf32>
    %31 = arith.mulf %30, %25 : vector<16x512xf32>
    %32 = arith.addf %25, %31 : vector<16x512xf32>
    %cst_16 = arith.constant 0.797884583 : f32
    %33 = vector.broadcast %cst_16 : f32 to vector<16x512xf32>
    %34 = arith.mulf %33, %32 : vector<16x512xf32>
    %35 = math.tanh %34 : vector<16x512xf32>
    %cst_17 = arith.constant 1.000000e+00 : f32
    %36 = vector.broadcast %cst_17 : f32 to vector<16x512xf32>
    %37 = arith.addf %36, %35 : vector<16x512xf32>
    %38 = arith.mulf %27, %37 : vector<16x512xf32>
    %39 = arith.truncf %38 : vector<16x512xf32> to vector<16x512xbf16>
    %c0_18 = arith.constant 0 : index
    %c0_19 = arith.constant 0 : index
    %40 = vector.load %arg6[%c0_18, %c0_19] : memref<512x256xbf16, #tpu.memory_space<vmem>>, vector<512x256xbf16>
    %cst_20 = arith.constant dense<0.000000e+00> : vector<16x256xf32>
    %41 = tpu.matmul %39, %40, %cst_20 {dimension_numbers = #tpu.dot_dimension_numbers<[1], [0], [0], [1], [0, 0, 1, 1], [], []>} : vector<16x512xbf16>, vector<512x256xbf16>, vector<16x256xf32> -> vector<16x256xf32>
    %c0_21 = arith.constant 0 : index
    %c0_22 = arith.constant 0 : index
    %42 = vector.load %arg7[%c0_21, %c0_22] : memref<1x256xf32, #tpu.memory_space<vmem>>, vector<1x256xf32>
    %43 = vector.broadcast %42 : vector<1x256xf32> to vector<16x256xf32>
    %44 = arith.addf %41, %43 : vector<16x256xf32>
    %45 = arith.mulf %44, %44 : vector<16x256xf32>
    %cst_23 = arith.constant dense<0.000000e+00> : vector<16xf32>
    %46 = vector.multi_reduction <add>, %45, %cst_23 [1] : vector<16x256xf32> to vector<16xf32>
    %47 = vector.shape_cast %46 : vector<16xf32> to vector<16x1xf32>
    %cst_24 = arith.constant 1.000000e-24 : f32
    %48 = vector.broadcast %cst_24 : f32 to vector<16x1xf32>
    %49 = arith.maximumf %47, %48 : vector<16x1xf32>
    %50 = math.rsqrt %49 : vector<16x1xf32>
    %51 = vector.broadcast %50 : vector<16x1xf32> to vector<16x256xf32>
    %52 = arith.mulf %44, %51 : vector<16x256xf32>
    %c0_25 = arith.constant 0 : index
    %c0_26 = arith.constant 0 : index
    %53 = vector.load %arg9[%c0_25, %c0_26] : memref<16x256xf32, #tpu.memory_space<vmem>>, vector<16x256xf32>
    tpu.vector_store %arg9[%c0_25, %c0_26], %52 {strides = array<i32>} : memref<16x256xf32, #tpu.memory_space<vmem>>, vector<16x256xf32>,
    %54 = arith.mulf %0, %0 : vector<16x256xf32>
    %cst_27 = arith.constant dense<0.000000e+00> : vector<16xf32>
    %55 = vector.multi_reduction <add>, %54, %cst_27 [1] : vector<16x256xf32> to vector<16xf32>
    %56 = vector.shape_cast %55 : vector<16xf32> to vector<16x1xf32>
    %cst_28 = arith.constant 1.000000e-24 : f32
    %57 = vector.broadcast %cst_28 : f32 to vector<16x1xf32>
    %58 = arith.maximumf %56, %57 : vector<16x1xf32>
    %59 = math.rsqrt %58 : vector<16x1xf32>
    %60 = vector.broadcast %59 : vector<16x1xf32> to vector<16x256xf32>
    %61 = arith.mulf %0, %60 : vector<16x256xf32>
    %62 = arith.truncf %61 : vector<16x256xf32> to vector<16x256xbf16>
    %c0_29 = arith.constant 0 : index
    %c0_30 = arith.constant 0 : index
    %63 = vector.load %arg8[%c0_29, %c0_30] : memref<256x128xbf16, #tpu.memory_space<vmem>>, vector<256x128xbf16>
    %cst_31 = arith.constant dense<0.000000e+00> : vector<16x128xf32>
    %64 = tpu.matmul %62, %63, %cst_31 {dimension_numbers = #tpu.dot_dimension_numbers<[1], [0], [0], [1], [0, 0, 1, 1], [], []>} : vector<16x256xbf16>, vector<256x128xbf16>, vector<16x128xf32> -> vector<16x128xf32>
    %c0_32 = arith.constant 0 : index
    %c0_33 = arith.constant 0 : index
    %65 = vector.load %arg10[%c0_32, %c0_33] : memref<16x128xf32, #tpu.memory_space<vmem>>, vector<16x128xf32>
    tpu.vector_store %arg10[%c0_32, %c0_33], %64 {strides = array<i32>} : memref<16x128xf32, #tpu.memory_space<vmem>>, vector<16x128xf32>,
    return
  }
  func.func @transform_0(%arg0: i32) -> (i32, i32) {
    %c0_i32 = arith.constant 0 : i32
    %c0_i32_0 = arith.constant 0 : i32
    return %arg0, %c0_i32 : i32, i32
  }
  func.func @transform_1(%arg0: i32) -> (i32, i32) {
    %c0_i32 = arith.constant 0 : i32
    %c0_i32_0 = arith.constant 0 : i32
    %c0_i32_1 = arith.constant 0 : i32
    return %c0_i32, %c0_i32_0 : i32, i32
  }
  func.func @transform_2(%arg0: i32) -> (i32, i32) {
    %c0_i32 = arith.constant 0 : i32
    %c0_i32_0 = arith.constant 0 : i32
    %c0_i32_1 = arith.constant 0 : i32
    return %c0_i32, %c0_i32_0 : i32, i32
  }
  func.func @transform_3(%arg0: i32) -> (i32, i32) {
    %c0_i32 = arith.constant 0 : i32
    %c0_i32_0 = arith.constant 0 : i32
    %c0_i32_1 = arith.constant 0 : i32
    return %c0_i32, %c0_i32_0 : i32, i32
  }
  func.func @transform_4(%arg0: i32) -> (i32, i32) {
    %c0_i32 = arith.constant 0 : i32
    %c0_i32_0 = arith.constant 0 : i32
    %c0_i32_1 = arith.constant 0 : i32
    return %c0_i32, %c0_i32_0 : i32, i32
  }
  func.func @transform_5(%arg0: i32) -> (i32, i32) {
    %c0_i32 = arith.constant 0 : i32
    %c0_i32_0 = arith.constant 0 : i32
    %c0_i32_1 = arith.constant 0 : i32
    return %c0_i32, %c0_i32_0 : i32, i32
  }
  func.func @transform_6(%arg0: i32) -> (i32, i32) {
    %c0_i32 = arith.constant 0 : i32
    %c0_i32_0 = arith.constant 0 : i32
    %c0_i32_1 = arith.constant 0 : i32
    return %c0_i32, %c0_i32_0 : i32, i32
  }
  func.func @transform_7(%arg0: i32) -> (i32, i32) {
    %c0_i32 = arith.constant 0 : i32
    %c0_i32_0 = arith.constant 0 : i32
    %c0_i32_1 = arith.constant 0 : i32
    return %c0_i32, %c0_i32_0 : i32, i32
  }
  func.func @transform_8(%arg0: i32) -> (i32, i32) {
    %c0_i32 = arith.constant 0 : i32
    %c0_i32_0 = arith.constant 0 : i32
    return %arg0, %c0_i32 : i32, i32
  }
  func.func @transform_9(%arg0: i32) -> (i32, i32) {
    %c0_i32 = arith.constant 0 : i32
    %c0_i32_0 = arith.constant 0 : i32
    return %arg0, %c0_i32 : i32, i32
  }
}

</mosaic_0001>

<llo_original>
// kernel: tpu_custom_call.1
$region0: #{tpu_custom_call.1}
  #allocation0 [shape = 'u32[]', space=smem, size = 0x4, offset = 0x4, fixed_abs, tag = 'smem constant byte address 0x4 - core index']
  #allocation1 [shape = 'u32[144,128]{1,0:T(1,128)}', space=vmem, size = 0x12000, scoped, tag = 'internal scratch']
  %s0 = inlined_call_operand.hbm [shape: f32[48,256], index: 0, kind: input, shape index: {}]
  %s1 = inlined_call_operand.hbm [shape: bf16[256,512], index: 1, kind: input, shape index: {}]
  %s2 = inlined_call_operand.hbm [shape: f32[1,512], index: 2, kind: input, shape index: {}]
  %s3 = inlined_call_operand.hbm [shape: bf16[512,512], index: 3, kind: input, shape index: {}]
  %s4 = inlined_call_operand.hbm [shape: f32[1,512], index: 4, kind: input, shape index: {}]
  %s5 = inlined_call_operand.hbm [shape: bf16[512,256], index: 5, kind: input, shape index: {}]
  %s6 = inlined_call_operand.hbm [shape: f32[1,256], index: 6, kind: input, shape index: {}]
  %s7 = inlined_call_operand.hbm [shape: bf16[256,128], index: 7, kind: input, shape index: {}]
  %s8 = inlined_call_operand.hbm [shape: f32[48,256], index: 8, kind: output, shape index: {0}]
  %s9 = inlined_call_operand.hbm [shape: f32[48,128], index: 9, kind: output, shape index: {1}]
  %10 = xla_tuple %s8, %s9
  %s11 = sld [smem:[#allocation0]]
  $region105: #{tpu_custom_call.1} parent=0
    _
  %s13 = ssub.s32 1, %s11
  %s14 = scalar_select 0, %s13, %s11
  $region1: #{tpu_custom_call.1} parent=0
    #allocation2 [shape = 'u8[32768]{0}', space=vmem, size = 0x8000, scoped, tag = 'input window, operand 0']
    #allocation3 [shape = 's32[2]{0}', space=sflag, size = 0x8, scoped, tag = 'scoped memory for tpu_custom_call.1']
    #allocation4 [shape = 's32[2]{0}', space=sflag, size = 0x8, scoped, tag = 'scoped memory for tpu_custom_call.1']
    #allocation5 [shape = 'u8[262144]{0}', space=vmem, size = 0x40000, scoped, tag = 'input window, operand 1, single buffered']
    #allocation6 [shape = 's32[1]{0}', space=sflag, size = 0x4, scoped, tag = 'scoped memory for tpu_custom_call.1']
    #allocation7 [shape = 'u8[2048]{0}', space=vmem, size = 0x800, scoped, tag = 'input window, operand 2, single buffered']
    #allocation8 [shape = 'u8[524288]{0}', space=vmem, size = 0x80000, scoped, tag = 'input window, operand 3, single buffered']
    #allocation9 [shape = 's32[1]{0}', space=sflag, size = 0x4, scoped, tag = 'scoped memory for tpu_custom_call.1']
    #allocation10 [shape = 'u8[2048]{0}', space=vmem, size = 0x800, scoped, tag = 'input window, operand 4, single buffered']
    #allocation11 [shape = 'u8[262144]{0}', space=vmem, size = 0x40000, scoped, tag = 'input window, operand 5, single buffered']
    #allocation12 [shape = 's32[1]{0}', space=sflag, size = 0x4, scoped, tag = 'scoped memory for tpu_custom_call.1']
    #allocation13 [shape = 'u8[1024]{0}', space=vmem, size = 0x400, scoped, tag = 'input window, operand 6, single buffered']
    #allocation14 [shape = 'u8[65536]{0}', space=vmem, size = 0x10000, scoped, tag = 'input window, operand 7, single buffered']
    #allocation15 [shape = 's32[1]{0}', space=sflag, size = 0x4, scoped, tag = 'scoped memory for tpu_custom_call.1']
    #allocation16 [shape = 'u8[32768]{0}', space=vmem, size = 0x8000, scoped, tag = 'output window, operand 0']
    #allocation17 [shape = 'u8[16384]{0}', space=vmem, size = 0x4000, scoped, tag = 'output window, operand 1']
    #allocation18 [shape = 's32[2]{0}', space=sflag, size = 0x8, scoped, tag = 'scoped memory for tpu_custom_call.1']
    %15 = vsyncpa [#allocation3], 0
    %s16 = scalar_lea.sflag [#allocation3], 1
    %17 = vsyncpa %s16, 0
    %18 = vsyncpa [#allocation6], 0
    %19 = vsyncpa [#allocation9], 0
    %20 = vsyncpa [#allocation12], 0
    %21 = vsyncpa [#allocation15], 0
    %22 = vsyncpa [#allocation4], 0
    %s23 = scalar_lea.sflag [#allocation4], 1
    %24 = vsyncpa %s23, 0
    %25 = vsyncpa [#allocation18], 0
    %s26 = scalar_lea.sflag [#allocation18], 1
    %27 = vsyncpa %s26, 0
    loop: start=0, step=1, limit=5
    $region2: #{tpu_custom_call.1} parent=1 // loop_pre_header
      _
    $region3: #{tpu_custom_call.1} parent=1 // loop_header
      %s29 = sphi 0, %s33
      %p30 = scmp.ge.s32.totalorder %s29, 5
      %s39 = sphi 0, %s41
      %s42 = sphi 0, %s39
      %s43 = sphi 0, %s42
      %s59 = sphi 0, %s43
      %s63 = sphi 0, %s63
      %s65 = sphi 0, %s63
      %s66 = sphi 0, %s65
      %s80 = sphi 0, %s66
      %s84 = sphi 0, %s84
      %s86 = sphi 0, %s84
      %s87 = sphi 0, %s86
      %s101 = sphi 0, %s87
      %s105 = sphi 0, %s105
      %s107 = sphi 0, %s105
      %s108 = sphi 0, %s107
      %s122 = sphi 0, %s108
      %s126 = sphi 0, %s126
      %s128 = sphi 0, %s126
      %s129 = sphi 0, %s128
      %s143 = sphi 0, %s129
      %s147 = sphi 0, %s147
      %s149 = sphi 0, %s147
      %s150 = sphi 0, %s149
      %s164 = sphi 0, %s150
      %s168 = sphi 0, %s168
      %s170 = sphi 0, %s168
      %s171 = sphi 0, %s170
      %s185 = sphi 0, %s171
      %s189 = sphi 0, %s189
      %s191 = sphi 0, %s189
      %s192 = sphi 0, %s191
      %s206 = sphi 0, %s192
      %s212 = sphi 0, %s214
      %s215 = sphi 0, %s212
      %s216 = sphi 0, %s215
      %s232 = sphi 0, %s216
      %s238 = sphi 0, %s240
      %s241 = sphi 0, %s238
      %s242 = sphi 0, %s241
      %s258 = sphi 0, %s242
    $region4: #{tpu_custom_call.1} parent=1 // loop_header_branch
      %32 = sbr.rel (%p30) target = $region8
    $region5: #{tpu_custom_call.1} parent=1 // loop_body
      %s34 = ssub.s32 %s29, 1
      %s35 = ssub.s32 %s29, 2
      %s36 = sadd.s32 %s29, 1
      %s37 = ssub.s32 %s29, %s36
      %p38 = scmp.eq.s32.totalorder %s37, 0
      %s40 = sadd.s32 %s39, 1
      %s41 = scalar_select %p38, %s39, %s40
      %p44 = pneg %p38
      %p45 = scmp.eq.s32.totalorder %s29, 2
      %p46 = por %p44, %p45
      %p47 = scmp.ne.s32.totalorder %s39, %s42
      %p48 = scmp.eq.s32.totalorder %s29, 0
      %p49 = por %p47, %p48
      %p50 = scmp.ne.s32.totalorder %s39, %s42
      %p51 = scmp.eq.s32.totalorder %s34, 2
      %p52 = por %p50, %p51
      %p53 = scmp.ne.s32.totalorder %s42, %s43
      %p54 = scmp.eq.s32.totalorder %s34, 0
      %p55 = por %p53, %p54
      %p56 = scmp.ne.s32.totalorder %s42, %s43
      %p57 = scmp.eq.s32.totalorder %s35, 2
      %p58 = por %p56, %p57
      %p60 = scmp.ne.s32.totalorder %s43, %s59
      %p61 = scmp.eq.s32.totalorder %s35, 0
      %p62 = por %p60, %p61
      %s64 = sadd.s32 %s63, 1
      %p67 = scmp.eq.s32.totalorder %s29, 2
      %p68 = scmp.ne.s32.totalorder %s63, %s65
      %p69 = scmp.eq.s32.totalorder %s29, 0
      %p70 = por %p68, %p69
      %p71 = scmp.ne.s32.totalorder %s63, %s65
      %p72 = scmp.eq.s32.totalorder %s34, 2
      %p73 = por %p71, %p72
      %p74 = scmp.ne.s32.totalorder %s65, %s66
      %p75 = scmp.eq.s32.totalorder %s34, 0
      %p76 = por %p74, %p75
      %p77 = scmp.ne.s32.totalorder %s65, %s66
      %p78 = scmp.eq.s32.totalorder %s35, 2
      %p79 = por %p77, %p78
      %p81 = scmp.ne.s32.totalorder %s66, %s80
      %p82 = scmp.eq.s32.totalorder %s35, 0
      %p83 = por %p81, %p82
      %s85 = sadd.s32 %s84, 1
      %p88 = scmp.eq.s32.totalorder %s29, 2
      %p89 = scmp.ne.s32.totalorder %s84, %s86
      %p90 = scmp.eq.s32.totalorder %s29, 0
      %p91 = por %p89, %p90
      %p92 = scmp.ne.s32.totalorder %s84, %s86
      %p93 = scmp.eq.s32.totalorder %s34, 2
      %p94 = por %p92, %p93
      %p95 = scmp.ne.s32.totalorder %s86, %s87
      %p96 = scmp.eq.s32.totalorder %s34, 0
      %p97 = por %p95, %p96
      %p98 = scmp.ne.s32.totalorder %s86, %s87
      %p99 = scmp.eq.s32.totalorder %s35, 2
      %p100 = por %p98, %p99
      %p102 = scmp.ne.s32.totalorder %s87, %s101
      %p103 = scmp.eq.s32.totalorder %s35, 0
      %p104 = por %p102, %p103
      %s106 = sadd.s32 %s105, 1
      %p109 = scmp.eq.s32.totalorder %s29, 2
      %p110 = scmp.ne.s32.totalorder %s105, %s107
      %p111 = scmp.eq.s32.totalorder %s29, 0
      %p112 = por %p110, %p111
      %p113 = scmp.ne.s32.totalorder %s105, %s107
      %p114 = scmp.eq.s32.totalorder %s34, 2
      %p115 = por %p113, %p114
      %p116 = scmp.ne.s32.totalorder %s107, %s108
      %p117 = scmp.eq.s32.totalorder %s34, 0
      %p118 = por %p116, %p117
      %p119 = scmp.ne.s32.totalorder %s107, %s108
      %p120 = scmp.eq.s32.totalorder %s35, 2
      %p121 = por %p119, %p120
      %p123 = scmp.ne.s32.totalorder %s108, %s122
      %p124 = scmp.eq.s32.totalorder %s35, 0
      %p125 = por %p123, %p124
      %s127 = sadd.s32 %s126, 1
      %p130 = scmp.eq.s32.totalorder %s29, 2
      %p131 = scmp.ne.s32.totalorder %s126, %s128
      %p132 = scmp.eq.s32.totalorder %s29, 0
      %p133 = por %p131, %p132
      %p134 = scmp.ne.s32.totalorder %s126, %s128
      %p135 = scmp.eq.s32.totalorder %s34, 2
      %p136 = por %p134, %p135
      %p137 = scmp.ne.s32.totalorder %s128, %s129
      %p138 = scmp.eq.s32.totalorder %s34, 0
      %p139 = por %p137, %p138
      %p140 = scmp.ne.s32.totalorder %s128, %s129
      %p141 = scmp.eq.s32.totalorder %s35, 2
      %p142 = por %p140, %p141
      %p144 = scmp.ne.s32.totalorder %s129, %s143
      %p145 = scmp.eq.s32.totalorder %s35, 0
      %p146 = por %p144, %p145
      %s148 = sadd.s32 %s147, 1
      %p151 = scmp.eq.s32.totalorder %s29, 2
      %p152 = scmp.ne.s32.totalorder %s147, %s149
      %p153 = scmp.eq.s32.totalorder %s29, 0
      %p154 = por %p152, %p153
      %p155 = scmp.ne.s32.totalorder %s147, %s149
      %p156 = scmp.eq.s32.totalorder %s34, 2
      %p157 = por %p155, %p156
      %p158 = scmp.ne.s32.totalorder %s149, %s150
      %p159 = scmp.eq.s32.totalorder %s34, 0
      %p160 = por %p158, %p159
      %p161 = scmp.ne.s32.totalorder %s149, %s150
      %p162 = scmp.eq.s32.totalorder %s35, 2
      %p163 = por %p161, %p162
      %p165 = scmp.ne.s32.totalorder %s150, %s164
      %p166 = scmp.eq.s32.totalorder %s35, 0
      %p167 = por %p165, %p166
      %s169 = sadd.s32 %s168, 1
      %p172 = scmp.eq.s32.totalorder %s29, 2
      %p173 = scmp.ne.s32.totalorder %s168, %s170
      %p174 = scmp.eq.s32.totalorder %s29, 0
      %p175 = por %p173, %p174
      %p176 = scmp.ne.s32.totalorder %s168, %s170
      %p177 = scmp.eq.s32.totalorder %s34, 2
      %p178 = por %p176, %p177
      %p179 = scmp.ne.s32.totalorder %s170, %s171
      %p180 = scmp.eq.s32.totalorder %s34, 0
      %p181 = por %p179, %p180
      %p182 = scmp.ne.s32.totalorder %s170, %s171
      %p183 = scmp.eq.s32.totalorder %s35, 2
      %p184 = por %p182, %p183
      %p186 = scmp.ne.s32.totalorder %s171, %s185
      %p187 = scmp.eq.s32.totalorder %s35, 0
      %p188 = por %p186, %p187
      %s190 = sadd.s32 %s189, 1
      %p193 = scmp.eq.s32.totalorder %s29, 2
      %p194 = scmp.ne.s32.totalorder %s189, %s191
      %p195 = scmp.eq.s32.totalorder %s29, 0
      %p196 = por %p194, %p195
      %p197 = scmp.ne.s32.totalorder %s189, %s191
      %p198 = scmp.eq.s32.totalorder %s34, 2
      %p199 = por %p197, %p198
      %p200 = scmp.ne.s32.totalorder %s191, %s192
      %p201 = scmp.eq.s32.totalorder %s34, 0
      %p202 = por %p200, %p201
      %p203 = scmp.ne.s32.totalorder %s191, %s192
      %p204 = scmp.eq.s32.totalorder %s35, 2
      %p205 = por %p203, %p204
      %p207 = scmp.ne.s32.totalorder %s192, %s206
      %p208 = scmp.eq.s32.totalorder %s35, 0
      %p209 = por %p207, %p208
      %s210 = ssub.s32 %s29, %s36
      %p211 = scmp.eq.s32.totalorder %s210, 0
      %s213 = sadd.s32 %s212, 1
      %s214 = scalar_select %p211, %s212, %s213
      %p217 = pneg %p211
      %p218 = scmp.eq.s32.totalorder %s29, 2
      %p219 = por %p217, %p218
      %p220 = scmp.ne.s32.totalorder %s212, %s215
      %p221 = scmp.eq.s32.totalorder %s29, 0
      %p222 = por %p220, %p221
      %p223 = scmp.ne.s32.totalorder %s212, %s215
      %p224 = scmp.eq.s32.totalorder %s34, 2
      %p225 = por %p223, %p224
      %p226 = scmp.ne.s32.totalorder %s215, %s216
      %p227 = scmp.eq.s32.totalorder %s34, 0
      %p228 = por %p226, %p227
      %p229 = scmp.ne.s32.totalorder %s215, %s216
      %p230 = scmp.eq.s32.totalorder %s35, 2
      %p231 = por %p229, %p230
      %p233 = scmp.ne.s32.totalorder %s216, %s232
      %p234 = scmp.eq.s32.totalorder %s35, 0
      %p235 = por %p233, %p234
      %s236 = ssub.s32 %s29, %s36
      %p237 = scmp.eq.s32.totalorder %s236, 0
      %s239 = sadd.s32 %s238, 1
      %s240 = scalar_select %p237, %s238, %s239
      %p243 = pneg %p237
      %p244 = scmp.eq.s32.totalorder %s29, 2
      %p245 = por %p243, %p244
      %p246 = scmp.ne.s32.totalorder %s238, %s241
      %p247 = scmp.eq.s32.totalorder %s29, 0
      %p248 = por %p246, %p247
      %p249 = scmp.ne.s32.totalorder %s238, %s241
      %p250 = scmp.eq.s32.totalorder %s34, 2
      %p251 = por %p249, %p250
      %p252 = scmp.ne.s32.totalorder %s241, %s242
      %p253 = scmp.eq.s32.totalorder %s34, 0
      %p254 = por %p252, %p253
      %p255 = scmp.ne.s32.totalorder %s241, %s242
      %p256 = scmp.eq.s32.totalorder %s35, 2
      %p257 = por %p255, %p256
      %p259 = scmp.ne.s32.totalorder %s242, %s258
      %p260 = scmp.eq.s32.totalorder %s35, 0
      %p261 = por %p259, %p260
      %p262 = scmp.le.s32.totalorder 1, %s29
      %p263 = scmp.lt.s32.totalorder %s29, 4
      %p264 = pnand %p262, %p263
      %p265 = pneg %p264
      // Predicated region
      $region9: #{tpu_custom_call.1} parent=5 // pred_check
        _
      $region10: #{tpu_custom_call.1} parent=5 // pred_check_branch
        %267 = sbr.rel (%p264) target = $region12
      $region11: #{tpu_custom_call.1} parent=5 // pred_region
        %s268 = ssub.s32 %s29, 1
        // Predicated region
        $region13: #{tpu_custom_call.1} parent=11 // pred_check
          %p269 = pneg %p76
        $region14: #{tpu_custom_call.1} parent=11 // pred_check_branch
          %271 = sbr.rel (%p269) target = $region16
        $region15: #{tpu_custom_call.1} parent=11 // pred_region
          %s273 = ssub.s32 8192, 8192
          %274 = vsyncadd [#allocation6], %s273
          %s275 = sshll.u32 [#allocation5], 4
          %s276 = int_to_ptr.vmem [resolvable:$true] %s275
          %281 = dma.hbm_to_vmem [thread:$0]  %s1, 8192, %s276, [#allocation6], 256, 256, 16
        $region16: #{tpu_custom_call.1} parent=11 // pred_fallthru
          _
        // Predicated region
        $region17: #{tpu_custom_call.1} parent=11 // pred_check
          %p282 = pneg %p97
        $region18: #{tpu_custom_call.1} parent=11 // pred_check_branch
          %284 = sbr.rel (%p282) target = $region20
        $region19: #{tpu_custom_call.1} parent=11 // pred_region
          %s286 = ssub.s32 64, 64
          %287 = vsyncadd [#allocation6], %s286
          %s289 = sshll.u32 [#allocation7], 4
          %s290 = int_to_ptr.vmem [resolvable:$true] %s289
          %292 = dma.hbm_to_vmem [thread:$0]  %s2, 64, %s290, [#allocation6]
        $region20: #{tpu_custom_call.1} parent=11 // pred_fallthru
          _
        // Predicated region
        $region21: #{tpu_custom_call.1} parent=11 // pred_check
          %p293 = pneg %p118
        $region22: #{tpu_custom_call.1} parent=11 // pred_check_branch
          %295 = sbr.rel (%p293) target = $region24
        $region23: #{tpu_custom_call.1} parent=11 // pred_region
          %s297 = ssub.s32 16384, 16384
          %298 = vsyncadd [#allocation9], %s297
          %s299 = sshll.u32 [#allocation8], 4
          %s300 = int_to_ptr.vmem [resolvable:$true] %s299
          %305 = dma.hbm_to_vmem [thread:$0]  %s3, 16384, %s300, [#allocation9], 256, 256, 16
        $region24: #{tpu_custom_call.1} parent=11 // pred_fallthru
          _
        // Predicated region
        $region25: #{tpu_custom_call.1} parent=11 // pred_check
          %p306 = pneg %p139
        $region26: #{tpu_custom_call.1} parent=11 // pred_check_branch
          %308 = sbr.rel (%p306) target = $region28
        $region27: #{tpu_custom_call.1} parent=11 // pred_region
          %s310 = ssub.s32 64, 64
          %311 = vsyncadd [#allocation9], %s310
          %s313 = sshll.u32 [#allocation10], 4
          %s314 = int_to_ptr.vmem [resolvable:$true] %s313
          %316 = dma.hbm_to_vmem [thread:$0]  %s4, 64, %s314, [#allocation9]
        $region28: #{tpu_custom_call.1} parent=11 // pred_fallthru
          _
        // Predicated region
        $region29: #{tpu_custom_call.1} parent=11 // pred_check
          %p317 = pneg %p160
        $region30: #{tpu_custom_call.1} parent=11 // pred_check_branch
          %319 = sbr.rel (%p317) target = $region32
        $region31: #{tpu_custom_call.1} parent=11 // pred_region
          %s321 = ssub.s32 8192, 8192
          %322 = vsyncadd [#allocation12], %s321
          %s323 = sshll.u32 [#allocation11], 4
          %s324 = int_to_ptr.vmem [resolvable:$true] %s323
          %329 = dma.hbm_to_vmem [thread:$0]  %s5, 8192, %s324, [#allocation12], 128, 128, 8
        $region32: #{tpu_custom_call.1} parent=11 // pred_fallthru
          _
        // Predicated region
        $region33: #{tpu_custom_call.1} parent=11 // pred_check
          %p330 = pneg %p181
        $region34: #{tpu_custom_call.1} parent=11 // pred_check_branch
          %332 = sbr.rel (%p330) target = $region36
        $region35: #{tpu_custom_call.1} parent=11 // pred_region
          %s334 = ssub.s32 32, 32
          %335 = vsyncadd [#allocation12], %s334
          %s337 = sshll.u32 [#allocation13], 4
          %s338 = int_to_ptr.vmem [resolvable:$true] %s337
          %340 = dma.hbm_to_vmem [thread:$0]  %s6, 32, %s338, [#allocation12]
        $region36: #{tpu_custom_call.1} parent=11 // pred_fallthru
          _
        // Predicated region
        $region37: #{tpu_custom_call.1} parent=11 // pred_check
          %p341 = pneg %p202
        $region38: #{tpu_custom_call.1} parent=11 // pred_check_branch
          %343 = sbr.rel (%p341) target = $region40
        $region39: #{tpu_custom_call.1} parent=11 // pred_region
          %s345 = ssub.s32 2048, 2048
          %346 = vsyncadd [#allocation15], %s345
          %s347 = sshll.u32 [#allocation14], 4
          %s348 = int_to_ptr.vmem [resolvable:$true] %s347
          %353 = dma.hbm_to_vmem [thread:$0]  %s7, 2048, %s348, [#allocation15], 64, 64, 4
        $region40: #{tpu_custom_call.1} parent=11 // pred_fallthru
          _
      $region12: #{tpu_custom_call.1} parent=5 // pred_fallthru
        _
      %p354 = scmp.lt.s32.totalorder %s29, 3
      // Predicated region
      $region41: #{tpu_custom_call.1} parent=5 // pred_check
        %p355 = pneg %p354
      $region42: #{tpu_custom_call.1} parent=5 // pred_check_branch
        %357 = sbr.rel (%p355) target = $region44
      $region43: #{tpu_custom_call.1} parent=5 // pred_region
        // Predicated region
        $region45: #{tpu_custom_call.1} parent=43 // pred_check
          %p358 = pneg %p49
        $region46: #{tpu_custom_call.1} parent=43 // pred_check_branch
          %360 = sbr.rel (%p358) target = $region48
        $region47: #{tpu_custom_call.1} parent=43 // pred_region
          %s361 = sand.u32 %s39, 1
          %s362 = scalar_lea.sflag [#allocation3], %s361
          %s363 = sand.u32 %s39, 1
          %s364 = smul.addr %s363, 32
          %s365 = scalar_lea.vmem [#allocation2], %s364
          %s366 = smul.u32 2, %s29
          %s368 = ssub.s32 512, 512
          %369 = vsyncadd %s362, %s368
          %s370 = smul.addr %s366, 2
          %s371 = smul.addr %s370, 128
          %s372 = scalar_lea.hbm %s0, %s371
          %s373 = sshll.u32 %s365, 4
          %s374 = int_to_ptr.vmem [resolvable:$true] %s373
          %379 = dma.hbm_to_vmem [thread:$0]  %s372, 512, %s374, %s362, 256, 256, 16
        $region48: #{tpu_custom_call.1} parent=43 // pred_fallthru
          _
      $region44: #{tpu_custom_call.1} parent=5 // pred_fallthru
        _
      %p380 = scmp.le.s32.totalorder 1, %s29
      %p381 = scmp.lt.s32.totalorder %s29, 4
      %p382 = pnand %p380, %p381
      %p383 = pneg %p382
      // Predicated region
      $region49: #{tpu_custom_call.1} parent=5 // pred_check
        _
      $region50: #{tpu_custom_call.1} parent=5 // pred_check_branch
        %385 = sbr.rel (%p382) target = $region52
      $region51: #{tpu_custom_call.1} parent=5 // pred_region
        %s386 = ssub.s32 %s29, 1
        %s387 = sand.u32 %s42, 1
        %s388 = scalar_lea.sflag [#allocation3], %s387
        %s389 = sand.u32 %s42, 1
        %s390 = smul.addr %s389, 32
        %s391 = scalar_lea.vmem [#allocation2], %s390
        // Predicated region
        $region53: #{tpu_custom_call.1} parent=51 // pred_check
          %p392 = pneg %p55
        $region54: #{tpu_custom_call.1} parent=51 // pred_check_branch
          %394 = sbr.rel (%p392) target = $region56
        $region55: #{tpu_custom_call.1} parent=51 // pred_region
          %395 = dma.done %s388, 512
        $region56: #{tpu_custom_call.1} parent=51 // pred_fallthru
          _
        // Predicated region
        $region57: #{tpu_custom_call.1} parent=51 // pred_check
          %p396 = pneg %p76
        $region58: #{tpu_custom_call.1} parent=51 // pred_check_branch
          %398 = sbr.rel (%p396) target = $region60
        $region59: #{tpu_custom_call.1} parent=51 // pred_region
          %399 = dma.done [#allocation6], 8192
        $region60: #{tpu_custom_call.1} parent=51 // pred_fallthru
          _
        // Predicated region
        $region61: #{tpu_custom_call.1} parent=51 // pred_check
          %p400 = pneg %p97
        $region62: #{tpu_custom_call.1} parent=51 // pred_check_branch
          %402 = sbr.rel (%p400) target = $region64
        $region63: #{tpu_custom_call.1} parent=51 // pred_region
          %403 = dma.done [#allocation6], 64
        $region64: #{tpu_custom_call.1} parent=51 // pred_fallthru
          _
        // Predicated region
        $region65: #{tpu_custom_call.1} parent=51 // pred_check
          %p404 = pneg %p118
        $region66: #{tpu_custom_call.1} parent=51 // pred_check_branch
          %406 = sbr.rel (%p404) target = $region68
        $region67: #{tpu_custom_call.1} parent=51 // pred_region
          %407 = dma.done [#allocation9], 16384
        $region68: #{tpu_custom_call.1} parent=51 // pred_fallthru
          _
        // Predicated region
        $region69: #{tpu_custom_call.1} parent=51 // pred_check
          %p408 = pneg %p139
        $region70: #{tpu_custom_call.1} parent=51 // pred_check_branch
          %410 = sbr.rel (%p408) target = $region72
        $region71: #{tpu_custom_call.1} parent=51 // pred_region
          %411 = dma.done [#allocation9], 64
        $region72: #{tpu_custom_call.1} parent=51 // pred_fallthru
          _
        // Predicated region
        $region73: #{tpu_custom_call.1} parent=51 // pred_check
          %p412 = pneg %p160
        $region74: #{tpu_custom_call.1} parent=51 // pred_check_branch
          %414 = sbr.rel (%p412) target = $region76
        $region75: #{tpu_custom_call.1} parent=51 // pred_region
          %415 = dma.done [#allocation12], 8192
        $region76: #{tpu_custom_call.1} parent=51 // pred_fallthru
          _
        // Predicated region
        $region77: #{tpu_custom_call.1} parent=51 // pred_check
          %p416 = pneg %p181
        $region78: #{tpu_custom_call.1} parent=51 // pred_check_branch
          %418 = sbr.rel (%p416) target = $region80
        $region79: #{tpu_custom_call.1} parent=51 // pred_region
          %419 = dma.done [#allocation12], 32
        $region80: #{tpu_custom_call.1} parent=51 // pred_fallthru
          _
        // Predicated region
        $region81: #{tpu_custom_call.1} parent=51 // pred_check
          %p420 = pneg %p202
        $region82: #{tpu_custom_call.1} parent=51 // pred_check_branch
          %422 = sbr.rel (%p420) target = $region84
        $region83: #{tpu_custom_call.1} parent=51 // pred_region
          %423 = dma.done [#allocation15], 2048
        $region84: #{tpu_custom_call.1} parent=51 // pred_fallthru
          _
        %s424 = sand.u32 %s42, 1
        %s425 = scalar_lea.sflag [#allocation3], %s424
        %s426 = sand.u32 %s42, 1
        %s427 = smul.addr %s426, 32
        %s428 = scalar_lea.vmem [#allocation2], %s427
        %p429 = pneg %p55
        %p430 = pneg %p52
        %p431 = pneg %p76
        %p432 = pneg %p73
        %p433 = pneg %p97
        %p434 = pneg %p94
        %p435 = pneg %p118
        %p436 = pneg %p115
        %p437 = pneg %p139
        %p438 = pneg %p136
        %p439 = pneg %p160
        %p440 = pneg %p157
        %p441 = pneg %p181
        %p442 = pneg %p178
        %p443 = pneg %p202
        %p444 = pneg %p199
        %p445 = pneg %p228
        %p446 = pneg %p225
        %s447 = sand.u32 %s215, 1
        %s448 = scalar_lea.sflag [#allocation4], %s447
        %s449 = sand.u32 %s215, 1
        %s450 = smul.addr %s449, 32
        %s451 = scalar_lea.vmem [#allocation16], %s450
        %p452 = pneg %p254
        %p453 = pneg %p251
        %s454 = sand.u32 %s241, 1
        %s455 = scalar_lea.sflag [#allocation18], %s454
        %s456 = sand.u32 %s241, 1
        %s457 = smul.addr %s456, 16
        %s458 = scalar_lea.vmem [#allocation17], %s457
        %s459 = smul.u32 2, %s34
        %s460 = smul.u32 2, %s34
        %s461 = smul.u32 2, %s34
        %v463 = vld [vmem:[%s391] sm:$0xff]
        %v464 = vld [vmem:[%s391 + $0x8] sm:$0xff]
        %v465 = vld [vmem:[%s391 + $0x10] sm:$0xff]
        %v466 = vld [vmem:[%s391 + $0x18] sm:$0xff]
        %v467 = vpack.c.bf16 %v465, %v463
        %v468 = vpack.c.bf16 %v466, %v464
        %v469 = vld [vmem:[#allocation5] sm:$0xff]
        %v470 = vld [vmem:[#allocation5 + $0x8] sm:$0xff]
        %v471 = vld [vmem:[#allocation5 + $0x10] sm:$0xff]
        %v472 = vld [vmem:[#allocation5 + $0x18] sm:$0xff]
        %v473 = vld [vmem:[#allocation5 + $0x20] sm:$0xff]
        %v474 = vld [vmem:[#allocation5 + $0x28] sm:$0xff]
        %v475 = vld [vmem:[#allocation5 + $0x30] sm:$0xff]
        %v476 = vld [vmem:[#allocation5 + $0x38] sm:$0xff]
        %v477 = vld [vmem:[#allocation5 + $0x40] sm:$0xff]
        %v478 = vld [vmem:[#allocation5 + $0x48] sm:$0xff]
        %v479 = vld [vmem:[#allocation5 + $0x50] sm:$0xff]
        %v480 = vld [vmem:[#allocation5 + $0x58] sm:$0xff]
        %v481 = vld [vmem:[#allocation5 + $0x60] sm:$0xff]
        %v482 = vld [vmem:[#allocation5 + $0x68] sm:$0xff]
        %v483 = vld [vmem:[#allocation5 + $0x70] sm:$0xff]
        %v484 = vld [vmem:[#allocation5 + $0x78] sm:$0xff]
        %v485 = vld [vmem:[#allocation5 + $0x80] sm:$0xff]
        %v486 = vld [vmem:[#allocation5 + $0x88] sm:$0xff]
        %v487 = vld [vmem:[#allocation5 + $0x90] sm:$0xff]
        %v488 = vld [vmem:[#allocation5 + $0x98] sm:$0xff]
        %v489 = vld [vmem:[#allocation5 + $0xa0] sm:$0xff]
        %v490 = vld [vmem:[#allocation5 + $0xa8] sm:$0xff]
        %v491 = vld [vmem:[#allocation5 + $0xb0] sm:$0xff]
        %v492 = vld [vmem:[#allocation5 + $0xb8] sm:$0xff]
        %v493 = vld [vmem:[#allocation5 + $0xc0] sm:$0xff]
        %v494 = vld [vmem:[#allocation5 + $0xc8] sm:$0xff]
        %v495 = vld [vmem:[#allocation5 + $0xd0] sm:$0xff]
        %v496 = vld [vmem:[#allocation5 + $0xd8] sm:$0xff]
        %v497 = vld [vmem:[#allocation5 + $0xe0] sm:$0xff]
        %v498 = vld [vmem:[#allocation5 + $0xe8] sm:$0xff]
        %v499 = vld [vmem:[#allocation5 + $0xf0] sm:$0xff]
        %v500 = vld [vmem:[#allocation5 + $0xf8] sm:$0xff]
        %v501 = vld [vmem:[#allocation5 + $0x100] sm:$0xff]
        %v502 = vld [vmem:[#allocation5 + $0x108] sm:$0xff]
        %v503 = vld [vmem:[#allocation5 + $0x110] sm:$0xff]
        %v504 = vld [vmem:[#allocation5 + $0x118] sm:$0xff]
        %v505 = vld [vmem:[#allocation5 + $0x120] sm:$0xff]
        %v506 = vld [vmem:[#allocation5 + $0x128] sm:$0xff]
        %v507 = vld [vmem:[#allocation5 + $0x130] sm:$0xff]
        %v508 = vld [vmem:[#allocation5 + $0x138] sm:$0xff]
        %v509 = vld [vmem:[#allocation5 + $0x140] sm:$0xff]
        %v510 = vld [vmem:[#allocation5 + $0x148] sm:$0xff]
        %v511 = vld [vmem:[#allocation5 + $0x150] sm:$0xff]
        %v512 = vld [vmem:[#allocation5 + $0x158] sm:$0xff]
        %v513 = vld [vmem:[#allocation5 + $0x160] sm:$0xff]
        %v514 = vld [vmem:[#allocation5 + $0x168] sm:$0xff]
        %v515 = vld [vmem:[#allocation5 + $0x170] sm:$0xff]
        %v516 = vld [vmem:[#allocation5 + $0x178] sm:$0xff]
        %v517 = vld [vmem:[#allocation5 + $0x180] sm:$0xff]
        %v518 = vld [vmem:[#allocation5 + $0x188] sm:$0xff]
        %v519 = vld [vmem:[#allocation5 + $0x190] sm:$0xff]
        %v520 = vld [vmem:[#allocation5 + $0x198] sm:$0xff]
        %v521 = vld [vmem:[#allocation5 + $0x1a0] sm:$0xff]
        %v522 = vld [vmem:[#allocation5 + $0x1a8] sm:$0xff]
        %v523 = vld [vmem:[#allocation5 + $0x1b0] sm:$0xff]
        %v524 = vld [vmem:[#allocation5 + $0x1b8] sm:$0xff]
        %v525 = vld [vmem:[#allocation5 + $0x1c0] sm:$0xff]
        %v526 = vld [vmem:[#allocation5 + $0x1c8] sm:$0xff]
        %v527 = vld [vmem:[#allocation5 + $0x1d0] sm:$0xff]
        %v528 = vld [vmem:[#allocation5 + $0x1d8] sm:$0xff]
        %v529 = vld [vmem:[#allocation5 + $0x1e0] sm:$0xff]
        %v530 = vld [vmem:[#allocation5 + $0x1e8] sm:$0xff]
        %v531 = vld [vmem:[#allocation5 + $0x1f0] sm:$0xff]
        %v532 = vld [vmem:[#allocation5 + $0x1f8] sm:$0xff]
        %v533 = vld [vmem:[#allocation7] sm:$0xf]
        %v535 = vlaneseq
        %v536 = vshrl.u32 %v535, 7
        %v537 = vsub.s32 0, %v536
        %v538 = vrot.slane %v533, %v537
        %v539 = vlaneseq
        %v540 = vshrl.u32 %v539, 7
        %v541 = vsub.s32 1, %v540
        %v542 = vrot.slane %v533, %v541
        %v543 = vlaneseq
        %v544 = vshrl.u32 %v543, 7
        %v545 = vsub.s32 2, %v544
        %v546 = vrot.slane %v533, %v545
        %v547 = vlaneseq
        %v548 = vshrl.u32 %v547, 7
        %v549 = vsub.s32 3, %v548
        %v550 = vrot.slane %v533, %v549
        %v619 = vunpack.c.l.b16 %v469
        %v620 = vunpack.c.h.b16 %v469
        %v621 = vunpack.c.l.b16 %v470
        %v622 = vunpack.c.h.b16 %v470
        %v623 = vunpack.c.l.b16 %v471
        %v624 = vunpack.c.h.b16 %v471
        %v625 = vunpack.c.l.b16 %v472
        %v626 = vunpack.c.h.b16 %v472
        %v627 = vunpack.c.l.b16 %v473
        %v628 = vunpack.c.h.b16 %v473
        %v629 = vunpack.c.l.b16 %v474
        %v630 = vunpack.c.h.b16 %v474
        %v631 = vunpack.c.l.b16 %v475
        %v632 = vunpack.c.h.b16 %v475
        %v633 = vunpack.c.l.b16 %v476
        %v634 = vunpack.c.h.b16 %v476
        %v635 = vunpack.c.l.b16 %v477
        %v636 = vunpack.c.h.b16 %v477
        %v637 = vunpack.c.l.b16 %v478
        %v638 = vunpack.c.h.b16 %v478
        %v639 = vunpack.c.l.b16 %v479
        %v640 = vunpack.c.h.b16 %v479
        %v641 = vunpack.c.l.b16 %v480
        %v642 = vunpack.c.h.b16 %v480
        %v643 = vunpack.c.l.b16 %v481
        %v644 = vunpack.c.h.b16 %v481
        %v645 = vunpack.c.l.b16 %v482
        %v646 = vunpack.c.h.b16 %v482
        %v647 = vunpack.c.l.b16 %v483
        %v648 = vunpack.c.h.b16 %v483
        %v649 = vunpack.c.l.b16 %v484
        %v650 = vunpack.c.h.b16 %v484
        %v651 = vunpack.c.l.b16 %v485
        %v652 = vunpack.c.h.b16 %v485
        %v653 = vunpack.c.l.b16 %v486
        %v654 = vunpack.c.h.b16 %v486
        %v655 = vunpack.c.l.b16 %v487
        %v656 = vunpack.c.h.b16 %v487
        %v657 = vunpack.c.l.b16 %v488
        %v658 = vunpack.c.h.b16 %v488
        %v659 = vunpack.c.l.b16 %v489
        %v660 = vunpack.c.h.b16 %v489
        %v661 = vunpack.c.l.b16 %v490
        %v662 = vunpack.c.h.b16 %v490
        %v663 = vunpack.c.l.b16 %v491
        %v664 = vunpack.c.h.b16 %v491
        %v665 = vunpack.c.l.b16 %v492
        %v666 = vunpack.c.h.b16 %v492
        %v667 = vunpack.c.l.b16 %v493
        %v668 = vunpack.c.h.b16 %v493
        %v669 = vunpack.c.l.b16 %v494
        %v670 = vunpack.c.h.b16 %v494
        %v671 = vunpack.c.l.b16 %v495
        %v672 = vunpack.c.h.b16 %v495
        %v673 = vunpack.c.l.b16 %v496
        %v674 = vunpack.c.h.b16 %v496
        %v675 = vunpack.c.l.b16 %v497
        %v676 = vunpack.c.h.b16 %v497
        %v677 = vunpack.c.l.b16 %v498
        %v678 = vunpack.c.h.b16 %v498
        %v679 = vunpack.c.l.b16 %v499
        %v680 = vunpack.c.h.b16 %v499
        %v681 = vunpack.c.l.b16 %v500
        %v682 = vunpack.c.h.b16 %v500
        %v683 = vunpack.c.l.b16 %v501
        %v684 = vunpack.c.h.b16 %v501
        %v685 = vunpack.c.l.b16 %v502
        %v686 = vunpack.c.h.b16 %v502
        %v687 = vunpack.c.l.b16 %v503
        %v688 = vunpack.c.h.b16 %v503
        %v689 = vunpack.c.l.b16 %v504
        %v690 = vunpack.c.h.b16 %v504
        %v691 = vunpack.c.l.b16 %v505
        %v692 = vunpack.c.h.b16 %v505
        %v693 = vunpack.c.l.b16 %v506
        %v694 = vunpack.c.h.b16 %v506
        %v695 = vunpack.c.l.b16 %v507
        %v696 = vunpack.c.h.b16 %v507
        %v697 = vunpack.c.l.b16 %v508
        %v698 = vunpack.c.h.b16 %v508
        %v699 = vunpack.c.l.b16 %v509
        %v700 = vunpack.c.h.b16 %v509
        %v701 = vunpack.c.l.b16 %v510
        %v702 = vunpack.c.h.b16 %v510
        %v703 = vunpack.c.l.b16 %v511
        %v704 = vunpack.c.h.b16 %v511
        %v705 = vunpack.c.l.b16 %v512
        %v706 = vunpack.c.h.b16 %v512
        %v707 = vunpack.c.l.b16 %v513
        %v708 = vunpack.c.h.b16 %v513
        %v709 = vunpack.c.l.b16 %v514
        %v710 = vunpack.c.h.b16 %v514
        %v711 = vunpack.c.l.b16 %v515
        %v712 = vunpack.c.h.b16 %v515
        %v713 = vunpack.c.l.b16 %v516
        %v714 = vunpack.c.h.b16 %v516
        %v715 = vunpack.c.l.b16 %v517
        %v716 = vunpack.c.h.b16 %v517
        %v717 = vunpack.c.l.b16 %v518
        %v718 = vunpack.c.h.b16 %v518
        %v719 = vunpack.c.l.b16 %v519
        %v720 = vunpack.c.h.b16 %v519
        %v721 = vunpack.c.l.b16 %v520
        %v722 = vunpack.c.h.b16 %v520
        %v723 = vunpack.c.l.b16 %v521
        %v724 = vunpack.c.h.b16 %v521
        %v725 = vunpack.c.l.b16 %v522
        %v726 = vunpack.c.h.b16 %v522
        %v727 = vunpack.c.l.b16 %v523
        %v728 = vunpack.c.h.b16 %v523
        %v729 = vunpack.c.l.b16 %v524
        %v730 = vunpack.c.h.b16 %v524
        %v731 = vunpack.c.l.b16 %v525
        %v732 = vunpack.c.h.b16 %v525
        %v733 = vunpack.c.l.b16 %v526
        %v734 = vunpack.c.h.b16 %v526
        %v735 = vunpack.c.l.b16 %v527
        %v736 = vunpack.c.h.b16 %v527
        %v737 = vunpack.c.l.b16 %v528
        %v738 = vunpack.c.h.b16 %v528
        %v739 = vunpack.c.l.b16 %v529
        %v740 = vunpack.c.h.b16 %v529
        %v741 = vunpack.c.l.b16 %v530
        %v742 = vunpack.c.h.b16 %v530
        %v743 = vunpack.c.l.b16 %v531
        %v744 = vunpack.c.h.b16 %v531
        %v745 = vunpack.c.l.b16 %v532
        %v746 = vunpack.c.h.b16 %v532
        %v747 = vpack.c.b16 %v623, %v619
        %v748 = vpack.c.b16 %v624, %v620
        %v749 = vpack.c.b16 %v625, %v621
        %v750 = vpack.c.b16 %v626, %v622
        %v751 = vpack.c.b16 %v631, %v627
        %v752 = vpack.c.b16 %v632, %v628
        %v753 = vpack.c.b16 %v633, %v629
        %v754 = vpack.c.b16 %v634, %v630
        %v755 = vpack.c.b16 %v639, %v635
        %v756 = vpack.c.b16 %v640, %v636
        %v757 = vpack.c.b16 %v641, %v637
        %v758 = vpack.c.b16 %v642, %v638
        %v759 = vpack.c.b16 %v647, %v643
        %v760 = vpack.c.b16 %v648, %v644
        %v761 = vpack.c.b16 %v649, %v645
        %v762 = vpack.c.b16 %v650, %v646
        %v763 = vpack.c.b16 %v655, %v651
        %v764 = vpack.c.b16 %v656, %v652
        %v765 = vpack.c.b16 %v657, %v653
        %v766 = vpack.c.b16 %v658, %v654
        %v767 = vpack.c.b16 %v663, %v659
        %v768 = vpack.c.b16 %v664, %v660
        %v769 = vpack.c.b16 %v665, %v661
        %v770 = vpack.c.b16 %v666, %v662
        %v771 = vpack.c.b16 %v671, %v667
        %v772 = vpack.c.b16 %v672, %v668
        %v773 = vpack.c.b16 %v673, %v669
        %v774 = vpack.c.b16 %v674, %v670
        %v775 = vpack.c.b16 %v679, %v675
        %v776 = vpack.c.b16 %v680, %v676
        %v777 = vpack.c.b16 %v681, %v677
        %v778 = vpack.c.b16 %v682, %v678
        %v779 = vpack.c.b16 %v687, %v683
        %v780 = vpack.c.b16 %v688, %v684
        %v781 = vpack.c.b16 %v689, %v685
        %v782 = vpack.c.b16 %v690, %v686
        %v783 = vpack.c.b16 %v695, %v691
        %v784 = vpack.c.b16 %v696, %v692
        %v785 = vpack.c.b16 %v697, %v693
        %v786 = vpack.c.b16 %v698, %v694
        %v787 = vpack.c.b16 %v703, %v699
        %v788 = vpack.c.b16 %v704, %v700
        %v789 = vpack.c.b16 %v705, %v701
        %v790 = vpack.c.b16 %v706, %v702
        %v791 = vpack.c.b16 %v711, %v707
        %v792 = vpack.c.b16 %v712, %v708
        %v793 = vpack.c.b16 %v713, %v709
        %v794 = vpack.c.b16 %v714, %v710
        %v795 = vpack.c.b16 %v719, %v715
        %v796 = vpack.c.b16 %v720, %v716
        %v797 = vpack.c.b16 %v721, %v717
        %v798 = vpack.c.b16 %v722, %v718
        %v799 = vpack.c.b16 %v727, %v723
        %v800 = vpack.c.b16 %v728, %v724
        %v801 = vpack.c.b16 %v729, %v725
        %v802 = vpack.c.b16 %v730, %v726
        %v803 = vpack.c.b16 %v735, %v731
        %v804 = vpack.c.b16 %v736, %v732
        %v805 = vpack.c.b16 %v737, %v733
        %v806 = vpack.c.b16 %v738, %v734
        %v807 = vpack.c.b16 %v743, %v739
        %v808 = vpack.c.b16 %v744, %v740
        %v809 = vpack.c.b16 %v745, %v741
        %v810 = vpack.c.b16 %v746, %v742
        %875 = vmatprep.subr.bf16.mxu0 %v748
        %876 = vmatpush1.bf16.msra.mxu0 %v747
        %877 = vmatprep.subr.bf16.mxu0 %v752
        %878 = vmatpush1.bf16.msra.mxu0 %v751
        %879 = vmatprep.subr.bf16.mxu0 %v756
        %880 = vmatpush1.bf16.msra.mxu0 %v755
        %881 = vmatprep.subr.bf16.mxu0 %v760
        %882 = vmatpush1.bf16.msra.mxu0 %v759
        %883 = vmatprep.subr.bf16.mxu0 %v764
        %884 = vmatpush1.bf16.msra.mxu0 %v763
        %885 = vmatprep.subr.bf16.mxu0 %v768
        %886 = vmatpush1.bf16.msra.mxu0 %v767
        %887 = vmatprep.subr.bf16.mxu0 %v772
        %888 = vmatpush1.bf16.msra.mxu0 %v771
        %889 = vmatprep.subr.bf16.mxu0 %v776
        %890 = vmatpush1.bf16.msra.mxu0 %v775
        %891 = vmatprep.subr.bf16.mxu0 %v780
        %892 = vmatpush1.bf16.msra.mxu0 %v779
        %893 = vmatprep.subr.bf16.mxu0 %v784
        %894 = vmatpush1.bf16.msra.mxu0 %v783
        %895 = vmatprep.subr.bf16.mxu0 %v788
        %896 = vmatpush1.bf16.msra.mxu0 %v787
        %897 = vmatprep.subr.bf16.mxu0 %v792
        %898 = vmatpush1.bf16.msra.mxu0 %v791
        %899 = vmatprep.subr.bf16.mxu0 %v796
        %900 = vmatpush1.bf16.msra.mxu0 %v795
        %901 = vmatprep.subr.bf16.mxu0 %v800
        %902 = vmatpush1.bf16.msra.mxu0 %v799
        %903 = vmatprep.subr.bf16.mxu0 %v804
        %904 = vmatpush1.bf16.msra.mxu0 %v803
        %905 = vmatprep.subr.bf16.mxu0 %v808
        %906 = vmatpush1.bf16.msra.mxu0 %v807
        %907 = vmatprep.mubr.bf16.mxu0 %v468
        %908 = vmatmul.mubr.bf16.gmra.mrb[0].mxu0 %v467
        %v909 = vpop.f32.mrb[0].mxu0
        %v910 = vadd.f32 %v538, %v909
        %v911 = vpop.f32.mrb[0].mxu0
        %v912 = vadd.f32 %v542, %v911
        %v913 = vpop.f32.mrb[0].mxu0
        %v914 = vadd.f32 %v538, %v913
        %v915 = vpop.f32.mrb[0].mxu0
        %v916 = vadd.f32 %v542, %v915
        %917 = vdwg.mxu0
        %918 = vmatprep.subr.bf16.mxu0 %v750
        %919 = vmatpush1.bf16.msra.mxu0 %v749
        %920 = vmatprep.subr.bf16.mxu0 %v754
        %921 = vmatpush1.bf16.msra.mxu0 %v753
        %922 = vmatprep.subr.bf16.mxu0 %v758
        %923 = vmatpush1.bf16.msra.mxu0 %v757
        %924 = vmatprep.subr.bf16.mxu0 %v762
        %925 = vmatpush1.bf16.msra.mxu0 %v761
        %926 = vmatprep.subr.bf16.mxu0 %v766
        %927 = vmatpush1.bf16.msra.mxu0 %v765
        %928 = vmatprep.subr.bf16.mxu0 %v770
        %929 = vmatpush1.bf16.msra.mxu0 %v769
        %930 = vmatprep.subr.bf16.mxu0 %v774
        %931 = vmatpush1.bf16.msra.mxu0 %v773
        %932 = vmatprep.subr.bf16.mxu0 %v778
        %933 = vmatpush1.bf16.msra.mxu0 %v777
        %934 = vmatprep.subr.bf16.mxu0 %v782
        %935 = vmatpush1.bf16.msra.mxu0 %v781
        %936 = vmatprep.subr.bf16.mxu0 %v786
        %937 = vmatpush1.bf16.msra.mxu0 %v785
        %938 = vmatprep.subr.bf16.mxu0 %v790
        %939 = vmatpush1.bf16.msra.mxu0 %v789
        %940 = vmatprep.subr.bf16.mxu0 %v794
        %941 = vmatpush1.bf16.msra.mxu0 %v793
        %942 = vmatprep.subr.bf16.mxu0 %v798
        %943 = vmatpush1.bf16.msra.mxu0 %v797
        %944 = vmatprep.subr.bf16.mxu0 %v802
        %945 = vmatpush1.bf16.msra.mxu0 %v801
        %946 = vmatprep.subr.bf16.mxu0 %v806
        %947 = vmatpush1.bf16.msra.mxu0 %v805
        %948 = vmatprep.subr.bf16.mxu0 %v810
        %949 = vmatpush1.bf16.msra.mxu0 %v809
        %950 = vmatprep.mubr.bf16.mxu0 %v468
        %951 = vmatmul.mubr.bf16.gmra.mrb[0].mxu0 %v467
        %v952 = vpop.f32.mrb[0].mxu0
        %v953 = vadd.f32 %v546, %v952
        %v954 = vpop.f32.mrb[0].mxu0
        %v955 = vadd.f32 %v550, %v954
        %v956 = vpop.f32.mrb[0].mxu0
        %v957 = vadd.f32 %v546, %v956
        %v958 = vpop.f32.mrb[0].mxu0
        %v959 = vadd.f32 %v550, %v958
        %960 = vdwg.mxu0
        %v961 = vmul.f32 %v910, 0.5
        %v962 = vmul.f32 %v912, 0.5
        %v963 = vmul.f32 %v953, 0.5
        %v964 = vmul.f32 %v955, 0.5
        %v965 = vmul.f32 %v914, 0.5
        %v966 = vmul.f32 %v916, 0.5
        %v967 = vmul.f32 %v957, 0.5
        %v968 = vmul.f32 %v959, 0.5
        %v969 = vmul.f32 %v910, 0.044715
        %v970 = vmul.f32 %v912, 0.044715
        %v971 = vmul.f32 %v953, 0.044715
        %v972 = vmul.f32 %v955, 0.044715
        %v973 = vmul.f32 %v914, 0.044715
        %v974 = vmul.f32 %v916, 0.044715
        %v975 = vmul.f32 %v957, 0.044715
        %v976 = vmul.f32 %v959, 0.044715
        %v977 = vmul.f32 %v969, %v910
        %v978 = vmul.f32 %v970, %v912
        %v979 = vmul.f32 %v971, %v953
        %v980 = vmul.f32 %v972, %v955
        %v981 = vmul.f32 %v973, %v914
        %v982 = vmul.f32 %v974, %v916
        %v983 = vmul.f32 %v975, %v957
        %v984 = vmul.f32 %v976, %v959
        %v985 = vmul.f32 %v977, %v910
        %v986 = vmul.f32 %v978, %v912
        %v987 = vmul.f32 %v979, %v953
        %v988 = vmul.f32 %v980, %v955
        %v989 = vmul.f32 %v981, %v914
        %v990 = vmul.f32 %v982, %v916
        %v991 = vmul.f32 %v983, %v957
        %v992 = vmul.f32 %v984, %v959
        %v993 = vadd.f32 %v910, %v985
        %v994 = vadd.f32 %v912, %v986
        %v995 = vadd.f32 %v953, %v987
        %v996 = vadd.f32 %v955, %v988
        %v997 = vadd.f32 %v914, %v989
        %v998 = vadd.f32 %v916, %v990
        %v999 = vadd.f32 %v957, %v991
        %v1000 = vadd.f32 %v959, %v992
        %v1001 = vmul.f32 %v993, 0.7978846
        %v1002 = vmul.f32 %v994, 0.7978846
        %v1003 = vmul.f32 %v995, 0.7978846
        %v1004 = vmul.f32 %v996, 0.7978846
        %v1005 = vmul.f32 %v997, 0.7978846
        %v1006 = vmul.f32 %v998, 0.7978846
        %v1007 = vmul.f32 %v999, 0.7978846
        %v1008 = vmul.f32 %v1000, 0.7978846
        %v1009 = vtanh.pop %v1001
        %v1010 = vtanh.pop %v1002
        %v1011 = vtanh.pop %v1003
        %v1012 = vtanh.pop %v1004
        %v1013 = vtanh.pop %v1005
        %v1014 = vtanh.pop %v1006
        %v1015 = vtanh.pop %v1007
        %v1016 = vtanh.pop %v1008
        %v1017 = vadd.f32 %v1009, 1.0
        %v1018 = vadd.f32 %v1010, 1.0
        %v1019 = vadd.f32 %v1011, 1.0
        %v1020 = vadd.f32 %v1012, 1.0
        %v1021 = vadd.f32 %v1013, 1.0
        %v1022 = vadd.f32 %v1014, 1.0
        %v1023 = vadd.f32 %v1015, 1.0
        %v1024 = vadd.f32 %v1016, 1.0
        %v1025 = vmul.f32 %v961, %v1017
        %v1026 = vmul.f32 %v962, %v1018
        %v1027 = vmul.f32 %v963, %v1019
        %v1028 = vmul.f32 %v964, %v1020
        %v1029 = vmul.f32 %v965, %v1021
        %v1030 = vmul.f32 %v966, %v1022
        %v1031 = vmul.f32 %v967, %v1023
        %v1032 = vmul.f32 %v968, %v1024
        %v1033 = vpack.c.bf16 %v1029, %v1025
        %v1034 = vpack.c.bf16 %v1030, %v1026
        %v1035 = vpack.c.bf16 %v1031, %v1027
        %v1036 = vpack.c.bf16 %v1032, %v1028
        %v1037 = vld [vmem:[#allocation8] sm:$0xff]
        %v1038 = vld [vmem:[#allocation8 + $0x8] sm:$0xff]
        %v1039 = vld [vmem:[#allocation8 + $0x10] sm:$0xff]
        %v1040 = vld [vmem:[#allocation8 + $0x18] sm:$0xff]
        %v1041 = vld [vmem:[#allocation8 + $0x20] sm:$0xff]
        %v1042 = vld [vmem:[#allocation8 + $0x28] sm:$0xff]
        %v1043 = vld [vmem:[#allocation8 + $0x30] sm:$0xff]
        %v1044 = vld [vmem:[#allocation8 + $0x38] sm:$0xff]
        %v1045 = vld [vmem:[#allocation8 + $0x40] sm:$0xff]
        %v1046 = vld [vmem:[#allocation8 + $0x48] sm:$0xff]
        %v1047 = vld [vmem:[#allocation8 + $0x50] sm:$0xff]
        %v1048 = vld [vmem:[#allocation8 + $0x58] sm:$0xff]
        %v1049 = vld [vmem:[#allocation8 + $0x60] sm:$0xff]
        %v1050 = vld [vmem:[#allocation8 + $0x68] sm:$0xff]
        %v1051 = vld [vmem:[#allocation8 + $0x70] sm:$0xff]
        %v1052 = vld [vmem:[#allocation8 + $0x78] sm:$0xff]
        %v1053 = vld [vmem:[#allocation8 + $0x80] sm:$0xff]
        %v1054 = vld [vmem:[#allocation8 + $0x88] sm:$0xff]
        %v1055 = vld [vmem:[#allocation8 + $0x90] sm:$0xff]
        %v1056 = vld [vmem:[#allocation8 + $0x98] sm:$0xff]
        %v1057 = vld [vmem:[#allocation8 + $0xa0] sm:$0xff]
        %v1058 = vld [vmem:[#allocation8 + $0xa8] sm:$0xff]
        %v1059 = vld [vmem:[#allocation8 + $0xb0] sm:$0xff]
        %v1060 = vld [vmem:[#allocation8 + $0xb8] sm:$0xff]
        %v1061 = vld [vmem:[#allocation8 + $0xc0] sm:$0xff]
        %v1062 = vld [vmem:[#allocation8 + $0xc8] sm:$0xff]
        %v1063 = vld [vmem:[#allocation8 + $0xd0] sm:$0xff]
        %v1064 = vld [vmem:[#allocation8 + $0xd8] sm:$0xff]
        %v1065 = vld [vmem:[#allocation8 + $0xe0] sm:$0xff]
        %v1066 = vld [vmem:[#allocation8 + $0xe8] sm:$0xff]
        %v1067 = vld [vmem:[#allocation8 + $0xf0] sm:$0xff]
        %v1068 = vld [vmem:[#allocation8 + $0xf8] sm:$0xff]
        %v1069 = vld [vmem:[#allocation8 + $0x100] sm:$0xff]
        %v1070 = vld [vmem:[#allocation8 + $0x108] sm:$0xff]
        %v1071 = vld [vmem:[#allocation8 + $0x110] sm:$0xff]
        %v1072 = vld [vmem:[#allocation8 + $0x118] sm:$0xff]
        %v1073 = vld [vmem:[#allocation8 + $0x120] sm:$0xff]
        %v1074 = vld [vmem:[#allocation8 + $0x128] sm:$0xff]
        %v1075 = vld [vmem:[#allocation8 + $0x130] sm:$0xff]
        %v1076 = vld [vmem:[#allocation8 + $0x138] sm:$0xff]
        %v1077 = vld [vmem:[#allocation8 + $0x140] sm:$0xff]
        %v1078 = vld [vmem:[#allocation8 + $0x148] sm:$0xff]
        %v1079 = vld [vmem:[#allocation8 + $0x150] sm:$0xff]
        %v1080 = vld [vmem:[#allocation8 + $0x158] sm:$0xff]
        %v1081 = vld [vmem:[#allocation8 + $0x160] sm:$0xff]
        %v1082 = vld [vmem:[#allocation8 + $0x168] sm:$0xff]
        %v1083 = vld [vmem:[#allocation8 + $0x170] sm:$0xff]
        %v1084 = vld [vmem:[#allocation8 + $0x178] sm:$0xff]
        %v1085 = vld [vmem:[#allocation8 + $0x180] sm:$0xff]
        %v1086 = vld [vmem:[#allocation8 + $0x188] sm:$0xff]
        %v1087 = vld [vmem:[#allocation8 + $0x190] sm:$0xff]
        %v1088 = vld [vmem:[#allocation8 + $0x198] sm:$0xff]
        %v1089 = vld [vmem:[#allocation8 + $0x1a0] sm:$0xff]
        %v1090 = vld [vmem:[#allocation8 + $0x1a8] sm:$0xff]
        %v1091 = vld [vmem:[#allocation8 + $0x1b0] sm:$0xff]
        %v1092 = vld [vmem:[#allocation8 + $0x1b8] sm:$0xff]
        %v1093 = vld [vmem:[#allocation8 + $0x1c0] sm:$0xff]
        %v1094 = vld [vmem:[#allocation8 + $0x1c8] sm:$0xff]
        %v1095 = vld [vmem:[#allocation8 + $0x1d0] sm:$0xff]
        %v1096 = vld [vmem:[#allocation8 + $0x1d8] sm:$0xff]
        %v1097 = vld [vmem:[#allocation8 + $0x1e0] sm:$0xff]
        %v1098 = vld [vmem:[#allocation8 + $0x1e8] sm:$0xff]
        %v1099 = vld [vmem:[#allocation8 + $0x1f0] sm:$0xff]
        %v1100 = vld [vmem:[#allocation8 + $0x1f8] sm:$0xff]
        %v1101 = vld [vmem:[#allocation8 + $0x200] sm:$0xff]
        %v1102 = vld [vmem:[#allocation8 + $0x208] sm:$0xff]
        %v1103 = vld [vmem:[#allocation8 + $0x210] sm:$0xff]
        %v1104 = vld [vmem:[#allocation8 + $0x218] sm:$0xff]
        %v1105 = vld [vmem:[#allocation8 + $0x220] sm:$0xff]
        %v1106 = vld [vmem:[#allocation8 + $0x228] sm:$0xff]
        %v1107 = vld [vmem:[#allocation8 + $0x230] sm:$0xff]
        %v1108 = vld [vmem:[#allocation8 + $0x238] sm:$0xff]
        %v1109 = vld [vmem:[#allocation8 + $0x240] sm:$0xff]
        %v1110 = vld [vmem:[#allocation8 + $0x248] sm:$0xff]
        %v1111 = vld [vmem:[#allocation8 + $0x250] sm:$0xff]
        %v1112 = vld [vmem:[#allocation8 + $0x258] sm:$0xff]
        %v1113 = vld [vmem:[#allocation8 + $0x260] sm:$0xff]
        %v1114 = vld [vmem:[#allocation8 + $0x268] sm:$0xff]
        %v1115 = vld [vmem:[#allocation8 + $0x270] sm:$0xff]
        %v1116 = vld [vmem:[#allocation8 + $0x278] sm:$0xff]
        %v1117 = vld [vmem:[#allocation8 + $0x280] sm:$0xff]
        %v1118 = vld [vmem:[#allocation8 + $0x288] sm:$0xff]
        %v1119 = vld [vmem:[#allocation8 + $0x290] sm:$0xff]
        %v1120 = vld [vmem:[#allocation8 + $0x298] sm:$0xff]
        %v1121 = vld [vmem:[#allocation8 + $0x2a0] sm:$0xff]
        %v1122 = vld [vmem:[#allocation8 + $0x2a8] sm:$0xff]
        %v1123 = vld [vmem:[#allocation8 + $0x2b0] sm:$0xff]
        %v1124 = vld [vmem:[#allocation8 + $0x2b8] sm:$0xff]
        %v1125 = vld [vmem:[#allocation8 + $0x2c0] sm:$0xff]
        %v1126 = vld [vmem:[#allocation8 + $0x2c8] sm:$0xff]
        %v1127 = vld [vmem:[#allocation8 + $0x2d0] sm:$0xff]
        %v1128 = vld [vmem:[#allocation8 + $0x2d8] sm:$0xff]
        %v1129 = vld [vmem:[#allocation8 + $0x2e0] sm:$0xff]
        %v1130 = vld [vmem:[#allocation8 + $0x2e8] sm:$0xff]
        %v1131 = vld [vmem:[#allocation8 + $0x2f0] sm:$0xff]
        %v1132 = vld [vmem:[#allocation8 + $0x2f8] sm:$0xff]
        %v1133 = vld [vmem:[#allocation8 + $0x300] sm:$0xff]
        %v1134 = vld [vmem:[#allocation8 + $0x308] sm:$0xff]
        %v1135 = vld [vmem:[#allocation8 + $0x310] sm:$0xff]
        %v1136 = vld [vmem:[#allocation8 + $0x318] sm:$0xff]
        %v1137 = vld [vmem:[#allocation8 + $0x320] sm:$0xff]
        %v1138 = vld [vmem:[#allocation8 + $0x328] sm:$0xff]
        %v1139 = vld [vmem:[#allocation8 + $0x330] sm:$0xff]
        %v1140 = vld [vmem:[#allocation8 + $0x338] sm:$0xff]
        %v1141 = vld [vmem:[#allocation8 + $0x340] sm:$0xff]
        %v1142 = vld [vmem:[#allocation8 + $0x348] sm:$0xff]
        %v1143 = vld [vmem:[#allocation8 + $0x350] sm:$0xff]
        %v1144 = vld [vmem:[#allocation8 + $0x358] sm:$0xff]
        %v1145 = vld [vmem:[#allocation8 + $0x360] sm:$0xff]
        %v1146 = vld [vmem:[#allocation8 + $0x368] sm:$0xff]
        %v1147 = vld [vmem:[#allocation8 + $0x370] sm:$0xff]
        %v1148 = vld [vmem:[#allocation8 + $0x378] sm:$0xff]
        %v1149 = vld [vmem:[#allocation8 + $0x380] sm:$0xff]
        %v1150 = vld [vmem:[#allocation8 + $0x388] sm:$0xff]
        %v1151 = vld [vmem:[#allocation8 + $0x390] sm:$0xff]
        %v1152 = vld [vmem:[#allocation8 + $0x398] sm:$0xff]
        %v1153 = vld [vmem:[#allocation8 + $0x3a0] sm:$0xff]
        %v1154 = vld [vmem:[#allocation8 + $0x3a8] sm:$0xff]
        %v1155 = vld [vmem:[#allocation8 + $0x3b0] sm:$0xff]
        %v1156 = vld [vmem:[#allocation8 + $0x3b8] sm:$0xff]
        %v1157 = vld [vmem:[#allocation8 + $0x3c0] sm:$0xff]
        %v1158 = vld [vmem:[#allocation8 + $0x3c8] sm:$0xff]
        %v1159 = vld [vmem:[#allocation8 + $0x3d0] sm:$0xff]
        %v1160 = vld [vmem:[#allocation8 + $0x3d8] sm:$0xff]
        %v1161 = vld [vmem:[#allocation8 + $0x3e0] sm:$0xff]
        %v1162 = vld [vmem:[#allocation8 + $0x3e8] sm:$0xff]
        %v1163 = vld [vmem:[#allocation8 + $0x3f0] sm:$0xff]
        %v1164 = vld [vmem:[#allocation8 + $0x3f8] sm:$0xff]
        %v1165 = vld [vmem:[#allocation10] sm:$0xf]
        %v1167 = vlaneseq
        %v1168 = vshrl.u32 %v1167, 7
        %v1169 = vsub.s32 0, %v1168
        %v1170 = vrot.slane %v1165, %v1169
        %v1171 = vlaneseq
        %v1172 = vshrl.u32 %v1171, 7
        %v1173 = vsub.s32 1, %v1172
        %v1174 = vrot.slane %v1165, %v1173
        %v1175 = vlaneseq
        %v1176 = vshrl.u32 %v1175, 7
        %v1177 = vsub.s32 2, %v1176
        %v1178 = vrot.slane %v1165, %v1177
        %v1179 = vlaneseq
        %v1180 = vshrl.u32 %v1179, 7
        %v1181 = vsub.s32 3, %v1180
        %v1182 = vrot.slane %v1165, %v1181
        %v1315 = vunpack.c.l.b16 %v1037
        %v1316 = vunpack.c.h.b16 %v1037
        %v1317 = vunpack.c.l.b16 %v1038
        %v1318 = vunpack.c.h.b16 %v1038
        %v1319 = vunpack.c.l.b16 %v1039
        %v1320 = vunpack.c.h.b16 %v1039
        %v1321 = vunpack.c.l.b16 %v1040
        %v1322 = vunpack.c.h.b16 %v1040
        %v1323 = vunpack.c.l.b16 %v1041
        %v1324 = vunpack.c.h.b16 %v1041
        %v1325 = vunpack.c.l.b16 %v1042
        %v1326 = vunpack.c.h.b16 %v1042
        %v1327 = vunpack.c.l.b16 %v1043
        %v1328 = vunpack.c.h.b16 %v1043
        %v1329 = vunpack.c.l.b16 %v1044
        %v1330 = vunpack.c.h.b16 %v1044
        %v1331 = vunpack.c.l.b16 %v1045
        %v1332 = vunpack.c.h.b16 %v1045
        %v1333 = vunpack.c.l.b16 %v1046
        %v1334 = vunpack.c.h.b16 %v1046
        %v1335 = vunpack.c.l.b16 %v1047
        %v1336 = vunpack.c.h.b16 %v1047
        %v1337 = vunpack.c.l.b16 %v1048
        %v1338 = vunpack.c.h.b16 %v1048
        %v1339 = vunpack.c.l.b16 %v1049
        %v1340 = vunpack.c.h.b16 %v1049
        %v1341 = vunpack.c.l.b16 %v1050
        %v1342 = vunpack.c.h.b16 %v1050
        %v1343 = vunpack.c.l.b16 %v1051
        %v1344 = vunpack.c.h.b16 %v1051
        %v1345 = vunpack.c.l.b16 %v1052
        %v1346 = vunpack.c.h.b16 %v1052
        %v1347 = vunpack.c.l.b16 %v1053
        %v1348 = vunpack.c.h.b16 %v1053
        %v1349 = vunpack.c.l.b16 %v1054
        %v1350 = vunpack.c.h.b16 %v1054
        %v1351 = vunpack.c.l.b16 %v1055
        %v1352 = vunpack.c.h.b16 %v1055
        %v1353 = vunpack.c.l.b16 %v1056
        %v1354 = vunpack.c.h.b16 %v1056
        %v1355 = vunpack.c.l.b16 %v1057
        %v1356 = vunpack.c.h.b16 %v1057
        %v1357 = vunpack.c.l.b16 %v1058
        %v1358 = vunpack.c.h.b16 %v1058
        %v1359 = vunpack.c.l.b16 %v1059
        %v1360 = vunpack.c.h.b16 %v1059
        %v1361 = vunpack.c.l.b16 %v1060
        %v1362 = vunpack.c.h.b16 %v1060
        %v1363 = vunpack.c.l.b16 %v1061
        %v1364 = vunpack.c.h.b16 %v1061
        %v1365 = vunpack.c.l.b16 %v1062
        %v1366 = vunpack.c.h.b16 %v1062
        %v1367 = vunpack.c.l.b16 %v1063
        %v1368 = vunpack.c.h.b16 %v1063
        %v1369 = vunpack.c.l.b16 %v1064
        %v1370 = vunpack.c.h.b16 %v1064
        %v1371 = vunpack.c.l.b16 %v1065
        %v1372 = vunpack.c.h.b16 %v1065
        %v1373 = vunpack.c.l.b16 %v1066
        %v1374 = vunpack.c.h.b16 %v1066
        %v1375 = vunpack.c.l.b16 %v1067
        %v1376 = vunpack.c.h.b16 %v1067
        %v1377 = vunpack.c.l.b16 %v1068
        %v1378 = vunpack.c.h.b16 %v1068
        %v1379 = vunpack.c.l.b16 %v1069
        %v1380 = vunpack.c.h.b16 %v1069
        %v1381 = vunpack.c.l.b16 %v1070
        %v1382 = vunpack.c.h.b16 %v1070
        %v1383 = vunpack.c.l.b16 %v1071
        %v1384 = vunpack.c.h.b16 %v1071
        %v1385 = vunpack.c.l.b16 %v1072
        %v1386 = vunpack.c.h.b16 %v1072
        %v1387 = vunpack.c.l.b16 %v1073
        %v1388 = vunpack.c.h.b16 %v1073
        %v1389 = vunpack.c.l.b16 %v1074
        %v1390 = vunpack.c.h.b16 %v1074
        %v1391 = vunpack.c.l.b16 %v1075
        %v1392 = vunpack.c.h.b16 %v1075
        %v1393 = vunpack.c.l.b16 %v1076
        %v1394 = vunpack.c.h.b16 %v1076
        %v1395 = vunpack.c.l.b16 %v1077
        %v1396 = vunpack.c.h.b16 %v1077
        %v1397 = vunpack.c.l.b16 %v1078
        %v1398 = vunpack.c.h.b16 %v1078
        %v1399 = vunpack.c.l.b16 %v1079
        %v1400 = vunpack.c.h.b16 %v1079
        %v1401 = vunpack.c.l.b16 %v1080
        %v1402 = vunpack.c.h.b16 %v1080
        %v1403 = vunpack.c.l.b16 %v1081
        %v1404 = vunpack.c.h.b16 %v1081
        %v1405 = vunpack.c.l.b16 %v1082
        %v1406 = vunpack.c.h.b16 %v1082
        %v1407 = vunpack.c.l.b16 %v1083
        %v1408 = vunpack.c.h.b16 %v1083
        %v1409 = vunpack.c.l.b16 %v1084
        %v1410 = vunpack.c.h.b16 %v1084
        %v1411 = vunpack.c.l.b16 %v1085
        %v1412 = vunpack.c.h.b16 %v1085
        %v1413 = vunpack.c.l.b16 %v1086
        %v1414 = vunpack.c.h.b16 %v1086
        %v1415 = vunpack.c.l.b16 %v1087
        %v1416 = vunpack.c.h.b16 %v1087
        %v1417 = vunpack.c.l.b16 %v1088
        %v1418 = vunpack.c.h.b16 %v1088
        %v1419 = vunpack.c.l.b16 %v1089
        %v1420 = vunpack.c.h.b16 %v1089
        %v1421 = vunpack.c.l.b16 %v1090
        %v1422 = vunpack.c.h.b16 %v1090
        %v1423 = vunpack.c.l.b16 %v1091
        %v1424 = vunpack.c.h.b16 %v1091
        %v1425 = vunpack.c.l.b16 %v1092
        %v1426 = vunpack.c.h.b16 %v1092
        %v1427 = vunpack.c.l.b16 %v1093
        %v1428 = vunpack.c.h.b16 %v1093
        %v1429 = vunpack.c.l.b16 %v1094
        %v1430 = vunpack.c.h.b16 %v1094
        %v1431 = vunpack.c.l.b16 %v1095
        %v1432 = vunpack.c.h.b16 %v1095
        %v1433 = vunpack.c.l.b16 %v1096
        %v1434 = vunpack.c.h.b16 %v1096
        %v1435 = vunpack.c.l.b16 %v1097
        %v1436 = vunpack.c.h.b16 %v1097
        %v1437 = vunpack.c.l.b16 %v1098
        %v1438 = vunpack.c.h.b16 %v1098
        %v1439 = vunpack.c.l.b16 %v1099
        %v1440 = vunpack.c.h.b16 %v1099
        %v1441 = vunpack.c.l.b16 %v1100
        %v1442 = vunpack.c.h.b16 %v1100
        %v1443 = vunpack.c.l.b16 %v1101
        %v1444 = vunpack.c.h.b16 %v1101
        %v1445 = vunpack.c.l.b16 %v1102
        %v1446 = vunpack.c.h.b16 %v1102
        %v1447 = vunpack.c.l.b16 %v1103
        %v1448 = vunpack.c.h.b16 %v1103
        %v1449 = vunpack.c.l.b16 %v1104
        %v1450 = vunpack.c.h.b16 %v1104
        %v1451 = vunpack.c.l.b16 %v1105
        %v1452 = vunpack.c.h.b16 %v1105
        %v1453 = vunpack.c.l.b16 %v1106
        %v1454 = vunpack.c.h.b16 %v1106
        %v1455 = vunpack.c.l.b16 %v1107
        %v1456 = vunpack.c.h.b16 %v1107
        %v1457 = vunpack.c.l.b16 %v1108
        %v1458 = vunpack.c.h.b16 %v1108
        %v1459 = vunpack.c.l.b16 %v1109
        %v1460 = vunpack.c.h.b16 %v1109
        %v1461 = vunpack.c.l.b16 %v1110
        %v1462 = vunpack.c.h.b16 %v1110
        %v1463 = vunpack.c.l.b16 %v1111
        %v1464 = vunpack.c.h.b16 %v1111
        %v1465 = vunpack.c.l.b16 %v1112
        %v1466 = vunpack.c.h.b16 %v1112
        %v1467 = vunpack.c.l.b16 %v1113
        %v1468 = vunpack.c.h.b16 %v1113
        %v1469 = vunpack.c.l.b16 %v1114
        %v1470 = vunpack.c.h.b16 %v1114
        %v1471 = vunpack.c.l.b16 %v1115
        %v1472 = vunpack.c.h.b16 %v1115
        %v1473 = vunpack.c.l.b16 %v1116
        %v1474 = vunpack.c.h.b16 %v1116
        %v1475 = vunpack.c.l.b16 %v1117
        %v1476 = vunpack.c.h.b16 %v1117
        %v1477 = vunpack.c.l.b16 %v1118
        %v1478 = vunpack.c.h.b16 %v1118
        %v1479 = vunpack.c.l.b16 %v1119
        %v1480 = vunpack.c.h.b16 %v1119
        %v1481 = vunpack.c.l.b16 %v1120
        %v1482 = vunpack.c.h.b16 %v1120
        %v1483 = vunpack.c.l.b16 %v1121
        %v1484 = vunpack.c.h.b16 %v1121
        %v1485 = vunpack.c.l.b16 %v1122
        %v1486 = vunpack.c.h.b16 %v1122
        %v1487 = vunpack.c.l.b16 %v1123
        %v1488 = vunpack.c.h.b16 %v1123
        %v1489 = vunpack.c.l.b16 %v1124
        %v1490 = vunpack.c.h.b16 %v1124
        %v1491 = vunpack.c.l.b16 %v1125
        %v1492 = vunpack.c.h.b16 %v1125
        %v1493 = vunpack.c.l.b16 %v1126
        %v1494 = vunpack.c.h.b16 %v1126
        %v1495 = vunpack.c.l.b16 %v1127
        %v1496 = vunpack.c.h.b16 %v1127
        %v1497 = vunpack.c.l.b16 %v1128
        %v1498 = vunpack.c.h.b16 %v1128
        %v1499 = vunpack.c.l.b16 %v1129
        %v1500 = vunpack.c.h.b16 %v1129
        %v1501 = vunpack.c.l.b16 %v1130
        %v1502 = vunpack.c.h.b16 %v1130
        %v1503 = vunpack.c.l.b16 %v1131
        %v1504 = vunpack.c.h.b16 %v1131
        %v1505 = vunpack.c.l.b16 %v1132
        %v1506 = vunpack.c.h.b16 %v1132
        %v1507 = vunpack.c.l.b16 %v1133
        %v1508 = vunpack.c.h.b16 %v1133
        %v1509 = vunpack.c.l.b16 %v1134
        %v1510 = vunpack.c.h.b16 %v1134
        %v1511 = vunpack.c.l.b16 %v1135
        %v1512 = vunpack.c.h.b16 %v1135
        %v1513 = vunpack.c.l.b16 %v1136
        %v1514 = vunpack.c.h.b16 %v1136
        %v1515 = vunpack.c.l.b16 %v1137
        %v1516 = vunpack.c.h.b16 %v1137
        %v1517 = vunpack.c.l.b16 %v1138
        %v1518 = vunpack.c.h.b16 %v1138
        %v1519 = vunpack.c.l.b16 %v1139
        %v1520 = vunpack.c.h.b16 %v1139
        %v1521 = vunpack.c.l.b16 %v1140
        %v1522 = vunpack.c.h.b16 %v1140
        %v1523 = vunpack.c.l.b16 %v1141
        %v1524 = vunpack.c.h.b16 %v1141
        %v1525 = vunpack.c.l.b16 %v1142
        %v1526 = vunpack.c.h.b16 %v1142
        %v1527 = vunpack.c.l.b16 %v1143
        %v1528 = vunpack.c.h.b16 %v1143
        %v1529 = vunpack.c.l.b16 %v1144
        %v1530 = vunpack.c.h.b16 %v1144
        %v1531 = vunpack.c.l.b16 %v1145
        %v1532 = vunpack.c.h.b16 %v1145
        %v1533 = vunpack.c.l.b16 %v1146
        %v1534 = vunpack.c.h.b16 %v1146
        %v1535 = vunpack.c.l.b16 %v1147
        %v1536 = vunpack.c.h.b16 %v1147
        %v1537 = vunpack.c.l.b16 %v1148
        %v1538 = vunpack.c.h.b16 %v1148
        %v1539 = vunpack.c.l.b16 %v1149
        %v1540 = vunpack.c.h.b16 %v1149
        %v1541 = vunpack.c.l.b16 %v1150
        %v1542 = vunpack.c.h.b16 %v1150
        %v1543 = vunpack.c.l.b16 %v1151
        %v1544 = vunpack.c.h.b16 %v1151
        %v1545 = vunpack.c.l.b16 %v1152
        %v1546 = vunpack.c.h.b16 %v1152
        %v1547 = vunpack.c.l.b16 %v1153
        %v1548 = vunpack.c.h.b16 %v1153
        %v1549 = vunpack.c.l.b16 %v1154
        %v1550 = vunpack.c.h.b16 %v1154
        %v1551 = vunpack.c.l.b16 %v1155
        %v1552 = vunpack.c.h.b16 %v1155
        %v1553 = vunpack.c.l.b16 %v1156
        %v1554 = vunpack.c.h.b16 %v1156
        %v1555 = vunpack.c.l.b16 %v1157
        %v1556 = vunpack.c.h.b16 %v1157
        %v1557 = vunpack.c.l.b16 %v1158
        %v1558 = vunpack.c.h.b16 %v1158
        %v1559 = vunpack.c.l.b16 %v1159
        %v1560 = vunpack.c.h.b16 %v1159
        %v1561 = vunpack.c.l.b16 %v1160
        %v1562 = vunpack.c.h.b16 %v1160
        %v1563 = vunpack.c.l.b16 %v1161
        %v1564 = vunpack.c.h.b16 %v1161
        %v1565 = vunpack.c.l.b16 %v1162
        %v1566 = vunpack.c.h.b16 %v1162
        %v1567 = vunpack.c.l.b16 %v1163
        %v1568 = vunpack.c.h.b16 %v1163
        %v1569 = vunpack.c.l.b16 %v1164
        %v1570 = vunpack.c.h.b16 %v1164
        %v1571 = vpack.c.b16 %v1319, %v1315
        %v1572 = vpack.c.b16 %v1320, %v1316
        %v1573 = vpack.c.b16 %v1321, %v1317
        %v1574 = vpack.c.b16 %v1322, %v1318
        %v1575 = vpack.c.b16 %v1327, %v1323
        %v1576 = vpack.c.b16 %v1328, %v1324
        %v1577 = vpack.c.b16 %v1329, %v1325
        %v1578 = vpack.c.b16 %v1330, %v1326
        %v1579 = vpack.c.b16 %v1335, %v1331
        %v1580 = vpack.c.b16 %v1336, %v1332
        %v1581 = vpack.c.b16 %v1337, %v1333
        %v1582 = vpack.c.b16 %v1338, %v1334
        %v1583 = vpack.c.b16 %v1343, %v1339
        %v1584 = vpack.c.b16 %v1344, %v1340
        %v1585 = vpack.c.b16 %v1345, %v1341
        %v1586 = vpack.c.b16 %v1346, %v1342
        %v1587 = vpack.c.b16 %v1351, %v1347
        %v1588 = vpack.c.b16 %v1352, %v1348
        %v1589 = vpack.c.b16 %v1353, %v1349
        %v1590 = vpack.c.b16 %v1354, %v1350
        %v1591 = vpack.c.b16 %v1359, %v1355
        %v1592 = vpack.c.b16 %v1360, %v1356
        %v1593 = vpack.c.b16 %v1361, %v1357
        %v1594 = vpack.c.b16 %v1362, %v1358
        %v1595 = vpack.c.b16 %v1367, %v1363
        %v1596 = vpack.c.b16 %v1368, %v1364
        %v1597 = vpack.c.b16 %v1369, %v1365
        %v1598 = vpack.c.b16 %v1370, %v1366
        %v1599 = vpack.c.b16 %v1375, %v1371
        %v1600 = vpack.c.b16 %v1376, %v1372
        %v1601 = vpack.c.b16 %v1377, %v1373
        %v1602 = vpack.c.b16 %v1378, %v1374
        %v1603 = vpack.c.b16 %v1383, %v1379
        %v1604 = vpack.c.b16 %v1384, %v1380
        %v1605 = vpack.c.b16 %v1385, %v1381
        %v1606 = vpack.c.b16 %v1386, %v1382
        %v1607 = vpack.c.b16 %v1391, %v1387
        %v1608 = vpack.c.b16 %v1392, %v1388
        %v1609 = vpack.c.b16 %v1393, %v1389
        %v1610 = vpack.c.b16 %v1394, %v1390
        %v1611 = vpack.c.b16 %v1399, %v1395
        %v1612 = vpack.c.b16 %v1400, %v1396
        %v1613 = vpack.c.b16 %v1401, %v1397
        %v1614 = vpack.c.b16 %v1402, %v1398
        %v1615 = vpack.c.b16 %v1407, %v1403
        %v1616 = vpack.c.b16 %v1408, %v1404
        %v1617 = vpack.c.b16 %v1409, %v1405
        %v1618 = vpack.c.b16 %v1410, %v1406
        %v1619 = vpack.c.b16 %v1415, %v1411
        %v1620 = vpack.c.b16 %v1416, %v1412
        %v1621 = vpack.c.b16 %v1417, %v1413
        %v1622 = vpack.c.b16 %v1418, %v1414
        %v1623 = vpack.c.b16 %v1423, %v1419
        %v1624 = vpack.c.b16 %v1424, %v1420
        %v1625 = vpack.c.b16 %v1425, %v1421
        %v1626 = vpack.c.b16 %v1426, %v1422
        %v1627 = vpack.c.b16 %v1431, %v1427
        %v1628 = vpack.c.b16 %v1432, %v1428
        %v1629 = vpack.c.b16 %v1433, %v1429
        %v1630 = vpack.c.b16 %v1434, %v1430
        %v1631 = vpack.c.b16 %v1439, %v1435
        %v1632 = vpack.c.b16 %v1440, %v1436
        %v1633 = vpack.c.b16 %v1441, %v1437
        %v1634 = vpack.c.b16 %v1442, %v1438
        %v1635 = vpack.c.b16 %v1447, %v1443
        %v1636 = vpack.c.b16 %v1448, %v1444
        %v1637 = vpack.c.b16 %v1449, %v1445
        %v1638 = vpack.c.b16 %v1450, %v1446
        %v1639 = vpack.c.b16 %v1455, %v1451
        %v1640 = vpack.c.b16 %v1456, %v1452
        %v1641 = vpack.c.b16 %v1457, %v1453
        %v1642 = vpack.c.b16 %v1458, %v1454
        %v1643 = vpack.c.b16 %v1463, %v1459
        %v1644 = vpack.c.b16 %v1464, %v1460
        %v1645 = vpack.c.b16 %v1465, %v1461
        %v1646 = vpack.c.b16 %v1466, %v1462
        %v1647 = vpack.c.b16 %v1471, %v1467
        %v1648 = vpack.c.b16 %v1472, %v1468
        %v1649 = vpack.c.b16 %v1473, %v1469
        %v1650 = vpack.c.b16 %v1474, %v1470
        %v1651 = vpack.c.b16 %v1479, %v1475
        %v1652 = vpack.c.b16 %v1480, %v1476
        %v1653 = vpack.c.b16 %v1481, %v1477
        %v1654 = vpack.c.b16 %v1482, %v1478
        %v1655 = vpack.c.b16 %v1487, %v1483
        %v1656 = vpack.c.b16 %v1488, %v1484
        %v1657 = vpack.c.b16 %v1489, %v1485
        %v1658 = vpack.c.b16 %v1490, %v1486
        %v1659 = vpack.c.b16 %v1495, %v1491
        %v1660 = vpack.c.b16 %v1496, %v1492
        %v1661 = vpack.c.b16 %v1497, %v1493
        %v1662 = vpack.c.b16 %v1498, %v1494
        %v1663 = vpack.c.b16 %v1503, %v1499
        %v1664 = vpack.c.b16 %v1504, %v1500
        %v1665 = vpack.c.b16 %v1505, %v1501
        %v1666 = vpack.c.b16 %v1506, %v1502
        %v1667 = vpack.c.b16 %v1511, %v1507
        %v1668 = vpack.c.b16 %v1512, %v1508
        %v1669 = vpack.c.b16 %v1513, %v1509
        %v1670 = vpack.c.b16 %v1514, %v1510
        %v1671 = vpack.c.b16 %v1519, %v1515
        %v1672 = vpack.c.b16 %v1520, %v1516
        %v1673 = vpack.c.b16 %v1521, %v1517
        %v1674 = vpack.c.b16 %v1522, %v1518
        %v1675 = vpack.c.b16 %v1527, %v1523
        %v1676 = vpack.c.b16 %v1528, %v1524
        %v1677 = vpack.c.b16 %v1529, %v1525
        %v1678 = vpack.c.b16 %v1530, %v1526
        %v1679 = vpack.c.b16 %v1535, %v1531
        %v1680 = vpack.c.b16 %v1536, %v1532
        %v1681 = vpack.c.b16 %v1537, %v1533
        %v1682 = vpack.c.b16 %v1538, %v1534
        %v1683 = vpack.c.b16 %v1543, %v1539
        %v1684 = vpack.c.b16 %v1544, %v1540
        %v1685 = vpack.c.b16 %v1545, %v1541
        %v1686 = vpack.c.b16 %v1546, %v1542
        %v1687 = vpack.c.b16 %v1551, %v1547
        %v1688 = vpack.c.b16 %v1552, %v1548
        %v1689 = vpack.c.b16 %v1553, %v1549
        %v1690 = vpack.c.b16 %v1554, %v1550
        %v1691 = vpack.c.b16 %v1559, %v1555
        %v1692 = vpack.c.b16 %v1560, %v1556
        %v1693 = vpack.c.b16 %v1561, %v1557
        %v1694 = vpack.c.b16 %v1562, %v1558
        %v1695 = vpack.c.b16 %v1567, %v1563
        %v1696 = vpack.c.b16 %v1568, %v1564
        %v1697 = vpack.c.b16 %v1569, %v1565
        %v1698 = vpack.c.b16 %v1570, %v1566
        %1827 = vmatprep.subr.bf16.mxu0 %v1572
        %1828 = vmatpush1.bf16.msra.mxu0 %v1571
        %1829 = vmatprep.subr.bf16.mxu0 %v1576
        %1830 = vmatpush1.bf16.msra.mxu0 %v1575
        %1831 = vmatprep.subr.bf16.mxu0 %v1580
        %1832 = vmatpush1.bf16.msra.mxu0 %v1579
        %1833 = vmatprep.subr.bf16.mxu0 %v1584
        %1834 = vmatpush1.bf16.msra.mxu0 %v1583
        %1835 = vmatprep.subr.bf16.mxu0 %v1588
        %1836 = vmatpush1.bf16.msra.mxu0 %v1587
        %1837 = vmatprep.subr.bf16.mxu0 %v1592
        %1838 = vmatpush1.bf16.msra.mxu0 %v1591
        %1839 = vmatprep.subr.bf16.mxu0 %v1596
        %1840 = vmatpush1.bf16.msra.mxu0 %v1595
        %1841 = vmatprep.subr.bf16.mxu0 %v1600
        %1842 = vmatpush1.bf16.msra.mxu0 %v1599
        %1843 = vmatprep.subr.bf16.mxu0 %v1604
        %1844 = vmatpush1.bf16.msra.mxu0 %v1603
        %1845 = vmatprep.subr.bf16.mxu0 %v1608
        %1846 = vmatpush1.bf16.msra.mxu0 %v1607
        %1847 = vmatprep.subr.bf16.mxu0 %v1612
        %1848 = vmatpush1.bf16.msra.mxu0 %v1611
        %1849 = vmatprep.subr.bf16.mxu0 %v1616
        %1850 = vmatpush1.bf16.msra.mxu0 %v1615
        %1851 = vmatprep.subr.bf16.mxu0 %v1620
        %1852 = vmatpush1.bf16.msra.mxu0 %v1619
        %1853 = vmatprep.subr.bf16.mxu0 %v1624
        %1854 = vmatpush1.bf16.msra.mxu0 %v1623
        %1855 = vmatprep.subr.bf16.mxu0 %v1628
        %1856 = vmatpush1.bf16.msra.mxu0 %v1627
        %1857 = vmatprep.subr.bf16.mxu0 %v1632
        %1858 = vmatpush1.bf16.msra.mxu0 %v1631
        %1859 = vmatprep.mubr.bf16.mxu0 %v1034
        %1860 = vmatmul.mubr.bf16.gmra.mrb[0].mxu0 %v1033
        %v1861 = vpop.f32.mrb[0].mxu0
        %v1862 = vadd.f32 %v1170, %v1861
        %v1863 = vpop.f32.mrb[0].mxu0
        %v1864 = vadd.f32 %v1174, %v1863
        %v1865 = vpop.f32.mrb[0].mxu0
        %v1866 = vadd.f32 %v1170, %v1865
        %v1867 = vpop.f32.mrb[0].mxu0
        %v1868 = vadd.f32 %v1174, %v1867
        %1869 = vdwg.mxu0
        %1870 = vmatprep.subr.bf16.mxu0 %v1636
        %1871 = vmatpush1.bf16.msra.mxu0 %v1635
        %1872 = vmatprep.subr.bf16.mxu0 %v1640
        %1873 = vmatpush1.bf16.msra.mxu0 %v1639
        %1874 = vmatprep.subr.bf16.mxu0 %v1644
        %1875 = vmatpush1.bf16.msra.mxu0 %v1643
        %1876 = vmatprep.subr.bf16.mxu0 %v1648
        %1877 = vmatpush1.bf16.msra.mxu0 %v1647
        %1878 = vmatprep.subr.bf16.mxu0 %v1652
        %1879 = vmatpush1.bf16.msra.mxu0 %v1651
        %1880 = vmatprep.subr.bf16.mxu0 %v1656
        %1881 = vmatpush1.bf16.msra.mxu0 %v1655
        %1882 = vmatprep.subr.bf16.mxu0 %v1660
        %1883 = vmatpush1.bf16.msra.mxu0 %v1659
        %1884 = vmatprep.subr.bf16.mxu0 %v1664
        %1885 = vmatpush1.bf16.msra.mxu0 %v1663
        %1886 = vmatprep.subr.bf16.mxu0 %v1668
        %1887 = vmatpush1.bf16.msra.mxu0 %v1667
        %1888 = vmatprep.subr.bf16.mxu0 %v1672
        %1889 = vmatpush1.bf16.msra.mxu0 %v1671
        %1890 = vmatprep.subr.bf16.mxu0 %v1676
        %1891 = vmatpush1.bf16.msra.mxu0 %v1675
        %1892 = vmatprep.subr.bf16.mxu0 %v1680
        %1893 = vmatpush1.bf16.msra.mxu0 %v1679
        %1894 = vmatprep.subr.bf16.mxu0 %v1684
        %1895 = vmatpush1.bf16.msra.mxu0 %v1683
        %1896 = vmatprep.subr.bf16.mxu0 %v1688
        %1897 = vmatpush1.bf16.msra.mxu0 %v1687
        %1898 = vmatprep.subr.bf16.mxu0 %v1692
        %1899 = vmatpush1.bf16.msra.mxu0 %v1691
        %1900 = vmatprep.subr.bf16.mxu0 %v1696
        %1901 = vmatpush1.bf16.msra.mxu0 %v1695
        %1902 = vmatprep.mubr.bf16.mxu0 %v1036
        %1903 = vmatmul.mubr.bf16.gmra.mrb[0].mxu0 %v1035
        %v1904 = vpop.f32.mrb[0].mxu0
        %v1905 = vadd.f32 %v1862, %v1904
        %v1906 = vpop.f32.mrb[0].mxu0
        %v1907 = vadd.f32 %v1864, %v1906
        %v1908 = vpop.f32.mrb[0].mxu0
        %v1909 = vadd.f32 %v1866, %v1908
        %v1910 = vpop.f32.mrb[0].mxu0
        %v1911 = vadd.f32 %v1868, %v1910
        %1912 = vdwg.mxu0
        %1913 = vmatprep.subr.bf16.mxu0 %v1574
        %1914 = vmatpush1.bf16.msra.mxu0 %v1573
        %1915 = vmatprep.subr.bf16.mxu0 %v1578
        %1916 = vmatpush1.bf16.msra.mxu0 %v1577
        %1917 = vmatprep.subr.bf16.mxu0 %v1582
        %1918 = vmatpush1.bf16.msra.mxu0 %v1581
        %1919 = vmatprep.subr.bf16.mxu0 %v1586
        %1920 = vmatpush1.bf16.msra.mxu0 %v1585
        %1921 = vmatprep.subr.bf16.mxu0 %v1590
        %1922 = vmatpush1.bf16.msra.mxu0 %v1589
        %1923 = vmatprep.subr.bf16.mxu0 %v1594
        %1924 = vmatpush1.bf16.msra.mxu0 %v1593
        %1925 = vmatprep.subr.bf16.mxu0 %v1598
        %1926 = vmatpush1.bf16.msra.mxu0 %v1597
        %1927 = vmatprep.subr.bf16.mxu0 %v1602
        %1928 = vmatpush1.bf16.msra.mxu0 %v1601
        %1929 = vmatprep.subr.bf16.mxu0 %v1606
        %1930 = vmatpush1.bf16.msra.mxu0 %v1605
        %1931 = vmatprep.subr.bf16.mxu0 %v1610
        %1932 = vmatpush1.bf16.msra.mxu0 %v1609
        %1933 = vmatprep.subr.bf16.mxu0 %v1614
        %1934 = vmatpush1.bf16.msra.mxu0 %v1613
        %1935 = vmatprep.subr.bf16.mxu0 %v1618
        %1936 = vmatpush1.bf16.msra.mxu0 %v1617
        %1937 = vmatprep.subr.bf16.mxu0 %v1622
        %1938 = vmatpush1.bf16.msra.mxu0 %v1621
        %1939 = vmatprep.subr.bf16.mxu0 %v1626
        %1940 = vmatpush1.bf16.msra.mxu0 %v1625
        %1941 = vmatprep.subr.bf16.mxu0 %v1630
        %1942 = vmatpush1.bf16.msra.mxu0 %v1629
        %1943 = vmatprep.subr.bf16.mxu0 %v1634
        %1944 = vmatpush1.bf16.msra.mxu0 %v1633
        %1945 = vmatprep.mubr.bf16.mxu0 %v1034
        %1946 = vmatmul.mubr.bf16.gmra.mrb[0].mxu0 %v1033
        %v1947 = vpop.f32.mrb[0].mxu0
        %v1948 = vadd.f32 %v1178, %v1947
        %v1949 = vpop.f32.mrb[0].mxu0
        %v1950 = vadd.f32 %v1182, %v1949
        %v1951 = vpop.f32.mrb[0].mxu0
        %v1952 = vadd.f32 %v1178, %v1951
        %v1953 = vpop.f32.mrb[0].mxu0
        %v1954 = vadd.f32 %v1182, %v1953
        %1955 = vdwg.mxu0
        %1956 = vmatprep.subr.bf16.mxu0 %v1638
        %1957 = vmatpush1.bf16.msra.mxu0 %v1637
        %1958 = vmatprep.subr.bf16.mxu0 %v1642
        %1959 = vmatpush1.bf16.msra.mxu0 %v1641
        %1960 = vmatprep.subr.bf16.mxu0 %v1646
        %1961 = vmatpush1.bf16.msra.mxu0 %v1645
        %1962 = vmatprep.subr.bf16.mxu0 %v1650
        %1963 = vmatpush1.bf16.msra.mxu0 %v1649
        %1964 = vmatprep.subr.bf16.mxu0 %v1654
        %1965 = vmatpush1.bf16.msra.mxu0 %v1653
        %1966 = vmatprep.subr.bf16.mxu0 %v1658
        %1967 = vmatpush1.bf16.msra.mxu0 %v1657
        %1968 = vmatprep.subr.bf16.mxu0 %v1662
        %1969 = vmatpush1.bf16.msra.mxu0 %v1661
        %1970 = vmatprep.subr.bf16.mxu0 %v1666
        %1971 = vmatpush1.bf16.msra.mxu0 %v1665
        %1972 = vmatprep.subr.bf16.mxu0 %v1670
        %1973 = vmatpush1.bf16.msra.mxu0 %v1669
        %1974 = vmatprep.subr.bf16.mxu0 %v1674
        %1975 = vmatpush1.bf16.msra.mxu0 %v1673
        %1976 = vmatprep.subr.bf16.mxu0 %v1678
        %1977 = vmatpush1.bf16.msra.mxu0 %v1677
        %1978 = vmatprep.subr.bf16.mxu0 %v1682
        %1979 = vmatpush1.bf16.msra.mxu0 %v1681
        %1980 = vmatprep.subr.bf16.mxu0 %v1686
        %1981 = vmatpush1.bf16.msra.mxu0 %v1685
        %1982 = vmatprep.subr.bf16.mxu0 %v1690
        %1983 = vmatpush1.bf16.msra.mxu0 %v1689
        %1984 = vmatprep.subr.bf16.mxu0 %v1694
        %1985 = vmatpush1.bf16.msra.mxu0 %v1693
        %1986 = vmatprep.subr.bf16.mxu0 %v1698
        %1987 = vmatpush1.bf16.msra.mxu0 %v1697
        %1988 = vmatprep.mubr.bf16.mxu0 %v1036
        %1989 = vmatmul.mubr.bf16.gmra.mrb[0].mxu0 %v1035
        %v1990 = vpop.f32.mrb[0].mxu0
        %v1991 = vadd.f32 %v1948, %v1990
        %v1992 = vpop.f32.mrb[0].mxu0
        %v1993 = vadd.f32 %v1950, %v1992
        %v1994 = vpop.f32.mrb[0].mxu0
        %v1995 = vadd.f32 %v1952, %v1994
        %v1996 = vpop.f32.mrb[0].mxu0
        %v1997 = vadd.f32 %v1954, %v1996
        %1998 = vdwg.mxu0
        %v1999 = vmul.f32 %v1905, 0.5
        %v2000 = vmul.f32 %v1907, 0.5
        %v2001 = vmul.f32 %v1991, 0.5
        %v2002 = vmul.f32 %v1993, 0.5
        %v2003 = vmul.f32 %v1909, 0.5
        %v2004 = vmul.f32 %v1911, 0.5
        %v2005 = vmul.f32 %v1995, 0.5
        %v2006 = vmul.f32 %v1997, 0.5
        %v2007 = vmul.f32 %v1905, 0.044715
        %v2008 = vmul.f32 %v1907, 0.044715
        %v2009 = vmul.f32 %v1991, 0.044715
        %v2010 = vmul.f32 %v1993, 0.044715
        %v2011 = vmul.f32 %v1909, 0.044715
        %v2012 = vmul.f32 %v1911, 0.044715
        %v2013 = vmul.f32 %v1995, 0.044715
        %v2014 = vmul.f32 %v1997, 0.044715
        %v2015 = vmul.f32 %v2007, %v1905
        %v2016 = vmul.f32 %v2008, %v1907
        %v2017 = vmul.f32 %v2009, %v1991
        %v2018 = vmul.f32 %v2010, %v1993
        %v2019 = vmul.f32 %v2011, %v1909
        %v2020 = vmul.f32 %v2012, %v1911
        %v2021 = vmul.f32 %v2013, %v1995
        %v2022 = vmul.f32 %v2014, %v1997
        %v2023 = vmul.f32 %v2015, %v1905
        %v2024 = vmul.f32 %v2016, %v1907
        %v2025 = vmul.f32 %v2017, %v1991
        %v2026 = vmul.f32 %v2018, %v1993
        %v2027 = vmul.f32 %v2019, %v1909
        %v2028 = vmul.f32 %v2020, %v1911
        %v2029 = vmul.f32 %v2021, %v1995
        %v2030 = vmul.f32 %v2022, %v1997
        %v2031 = vadd.f32 %v1905, %v2023
        %v2032 = vadd.f32 %v1907, %v2024
        %v2033 = vadd.f32 %v1991, %v2025
        %v2034 = vadd.f32 %v1993, %v2026
        %v2035 = vadd.f32 %v1909, %v2027
        %v2036 = vadd.f32 %v1911, %v2028
        %v2037 = vadd.f32 %v1995, %v2029
        %v2038 = vadd.f32 %v1997, %v2030
        %v2039 = vmul.f32 %v2031, 0.7978846
        %v2040 = vmul.f32 %v2032, 0.7978846
        %v2041 = vmul.f32 %v2033, 0.7978846
        %v2042 = vmul.f32 %v2034, 0.7978846
        %v2043 = vmul.f32 %v2035, 0.7978846
        %v2044 = vmul.f32 %v2036, 0.7978846
        %v2045 = vmul.f32 %v2037, 0.7978846
        %v2046 = vmul.f32 %v2038, 0.7978846
        %v2047 = vtanh.pop %v2039
        %v2048 = vtanh.pop %v2040
        %v2049 = vtanh.pop %v2041
        %v2050 = vtanh.pop %v2042
        %v2051 = vtanh.pop %v2043
        %v2052 = vtanh.pop %v2044
        %v2053 = vtanh.pop %v2045
        %v2054 = vtanh.pop %v2046
        %v2055 = vadd.f32 %v2047, 1.0
        %v2056 = vadd.f32 %v2048, 1.0
        %v2057 = vadd.f32 %v2049, 1.0
        %v2058 = vadd.f32 %v2050, 1.0
        %v2059 = vadd.f32 %v2051, 1.0
        %v2060 = vadd.f32 %v2052, 1.0
        %v2061 = vadd.f32 %v2053, 1.0
        %v2062 = vadd.f32 %v2054, 1.0
        %v2063 = vmul.f32 %v1999, %v2055
        %v2064 = vmul.f32 %v2000, %v2056
        %v2065 = vmul.f32 %v2001, %v2057
        %v2066 = vmul.f32 %v2002, %v2058
        %v2067 = vmul.f32 %v2003, %v2059
        %v2068 = vmul.f32 %v2004, %v2060
        %v2069 = vmul.f32 %v2005, %v2061
        %v2070 = vmul.f32 %v2006, %v2062
        %v2071 = vpack.c.bf16 %v2067, %v2063
        %v2072 = vpack.c.bf16 %v2068, %v2064
        %v2073 = vpack.c.bf16 %v2069, %v2065
        %v2074 = vpack.c.bf16 %v2070, %v2066
        %v2075 = vld [vmem:[#allocation11] sm:$0xff]
        %v2076 = vld [vmem:[#allocation11 + $0x8] sm:$0xff]
        %v2077 = vld [vmem:[#allocation11 + $0x10] sm:$0xff]
        %v2078 = vld [vmem:[#allocation11 + $0x18] sm:$0xff]
        %v2079 = vld [vmem:[#allocation11 + $0x20] sm:$0xff]
        %v2080 = vld [vmem:[#allocation11 + $0x28] sm:$0xff]
        %v2081 = vld [vmem:[#allocation11 + $0x30] sm:$0xff]
        %v2082 = vld [vmem:[#allocation11 + $0x38] sm:$0xff]
        %v2083 = vld [vmem:[#allocation11 + $0x40] sm:$0xff]
        %v2084 = vld [vmem:[#allocation11 + $0x48] sm:$0xff]
        %v2085 = vld [vmem:[#allocation11 + $0x50] sm:$0xff]
        %v2086 = vld [vmem:[#allocation11 + $0x58] sm:$0xff]
        %v2087 = vld [vmem:[#allocation11 + $0x60] sm:$0xff]
        %v2088 = vld [vmem:[#allocation11 + $0x68] sm:$0xff]
        %v2089 = vld [vmem:[#allocation11 + $0x70] sm:$0xff]
        %v2090 = vld [vmem:[#allocation11 + $0x78] sm:$0xff]
        %v2091 = vld [vmem:[#allocation11 + $0x80] sm:$0xff]
        %v2092 = vld [vmem:[#allocation11 + $0x88] sm:$0xff]
        %v2093 = vld [vmem:[#allocation11 + $0x90] sm:$0xff]
        %v2094 = vld [vmem:[#allocation11 + $0x98] sm:$0xff]
        %v2095 = vld [vmem:[#allocation11 + $0xa0] sm:$0xff]
        %v2096 = vld [vmem:[#allocation11 + $0xa8] sm:$0xff]
        %v2097 = vld [vmem:[#allocation11 + $0xb0] sm:$0xff]
        %v2098 = vld [vmem:[#allocation11 + $0xb8] sm:$0xff]
        %v2099 = vld [vmem:[#allocation11 + $0xc0] sm:$0xff]
        %v2100 = vld [vmem:[#allocation11 + $0xc8] sm:$0xff]
        %v2101 = vld [vmem:[#allocation11 + $0xd0] sm:$0xff]
        %v2102 = vld [vmem:[#allocation11 + $0xd8] sm:$0xff]
        %v2103 = vld [vmem:[#allocation11 + $0xe0] sm:$0xff]
        %v2104 = vld [vmem:[#allocation11 + $0xe8] sm:$0xff]
        %v2105 = vld [vmem:[#allocation11 + $0xf0] sm:$0xff]
        %v2106 = vld [vmem:[#allocation11 + $0xf8] sm:$0xff]
        %v2107 = vld [vmem:[#allocation11 + $0x100] sm:$0xff]
        %v2108 = vld [vmem:[#allocation11 + $0x108] sm:$0xff]
        %v2109 = vld [vmem:[#allocation11 + $0x110] sm:$0xff]
        %v2110 = vld [vmem:[#allocation11 + $0x118] sm:$0xff]
        %v2111 = vld [vmem:[#allocation11 + $0x120] sm:$0xff]
        %v2112 = vld [vmem:[#allocation11 + $0x128] sm:$0xff]
        %v2113 = vld [vmem:[#allocation11 + $0x130] sm:$0xff]
        %v2114 = vld [vmem:[#allocation11 + $0x138] sm:$0xff]
        %v2115 = vld [vmem:[#allocation11 + $0x140] sm:$0xff]
        %v2116 = vld [vmem:[#allocation11 + $0x148] sm:$0xff]
        %v2117 = vld [vmem:[#allocation11 + $0x150] sm:$0xff]
        %v2118 = vld [vmem:[#allocation11 + $0x158] sm:$0xff]
        %v2119 = vld [vmem:[#allocation11 + $0x160] sm:$0xff]
        %v2120 = vld [vmem:[#allocation11 + $0x168] sm:$0xff]
        %v2121 = vld [vmem:[#allocation11 + $0x170] sm:$0xff]
        %v2122 = vld [vmem:[#allocation11 + $0x178] sm:$0xff]
        %v2123 = vld [vmem:[#allocation11 + $0x180] sm:$0xff]
        %v2124 = vld [vmem:[#allocation11 + $0x188] sm:$0xff]
        %v2125 = vld [vmem:[#allocation11 + $0x190] sm:$0xff]
        %v2126 = vld [vmem:[#allocation11 + $0x198] sm:$0xff]
        %v2127 = vld [vmem:[#allocation11 + $0x1a0] sm:$0xff]
        %v2128 = vld [vmem:[#allocation11 + $0x1a8] sm:$0xff]
        %v2129 = vld [vmem:[#allocation11 + $0x1b0] sm:$0xff]
        %v2130 = vld [vmem:[#allocation11 + $0x1b8] sm:$0xff]
        %v2131 = vld [vmem:[#allocation11 + $0x1c0] sm:$0xff]
        %v2132 = vld [vmem:[#allocation11 + $0x1c8] sm:$0xff]
        %v2133 = vld [vmem:[#allocation11 + $0x1d0] sm:$0xff]
        %v2134 = vld [vmem:[#allocation11 + $0x1d8] sm:$0xff]
        %v2135 = vld [vmem:[#allocation11 + $0x1e0] sm:$0xff]
        %v2136 = vld [vmem:[#allocation11 + $0x1e8] sm:$0xff]
        %v2137 = vld [vmem:[#allocation11 + $0x1f0] sm:$0xff]
        %v2138 = vld [vmem:[#allocation11 + $0x1f8] sm:$0xff]
        %v2139 = vld [vmem:[#allocation13] sm:$0x3]
        %v2141 = vlaneseq
        %v2142 = vshrl.u32 %v2141, 7
        %v2143 = vsub.s32 0, %v2142
        %v2144 = vrot.slane %v2139, %v2143
        %v2145 = vlaneseq
        %v2146 = vshrl.u32 %v2145, 7
        %v2147 = vsub.s32 1, %v2146
        %v2148 = vrot.slane %v2139, %v2147
        %v2215 = vunpack.c.l.b16 %v2075
        %v2216 = vunpack.c.h.b16 %v2075
        %v2217 = vunpack.c.l.b16 %v2076
        %v2218 = vunpack.c.h.b16 %v2076
        %v2219 = vunpack.c.l.b16 %v2077
        %v2220 = vunpack.c.h.b16 %v2077
        %v2221 = vunpack.c.l.b16 %v2078
        %v2222 = vunpack.c.h.b16 %v2078
        %v2223 = vunpack.c.l.b16 %v2079
        %v2224 = vunpack.c.h.b16 %v2079
        %v2225 = vunpack.c.l.b16 %v2080
        %v2226 = vunpack.c.h.b16 %v2080
        %v2227 = vunpack.c.l.b16 %v2081
        %v2228 = vunpack.c.h.b16 %v2081
        %v2229 = vunpack.c.l.b16 %v2082
        %v2230 = vunpack.c.h.b16 %v2082
        %v2231 = vunpack.c.l.b16 %v2083
        %v2232 = vunpack.c.h.b16 %v2083
        %v2233 = vunpack.c.l.b16 %v2084
        %v2234 = vunpack.c.h.b16 %v2084
        %v2235 = vunpack.c.l.b16 %v2085
        %v2236 = vunpack.c.h.b16 %v2085
        %v2237 = vunpack.c.l.b16 %v2086
        %v2238 = vunpack.c.h.b16 %v2086
        %v2239 = vunpack.c.l.b16 %v2087
        %v2240 = vunpack.c.h.b16 %v2087
        %v2241 = vunpack.c.l.b16 %v2088
        %v2242 = vunpack.c.h.b16 %v2088
        %v2243 = vunpack.c.l.b16 %v2089
        %v2244 = vunpack.c.h.b16 %v2089
        %v2245 = vunpack.c.l.b16 %v2090
        %v2246 = vunpack.c.h.b16 %v2090
        %v2247 = vunpack.c.l.b16 %v2091
        %v2248 = vunpack.c.h.b16 %v2091
        %v2249 = vunpack.c.l.b16 %v2092
        %v2250 = vunpack.c.h.b16 %v2092
        %v2251 = vunpack.c.l.b16 %v2093
        %v2252 = vunpack.c.h.b16 %v2093
        %v2253 = vunpack.c.l.b16 %v2094
        %v2254 = vunpack.c.h.b16 %v2094
        %v2255 = vunpack.c.l.b16 %v2095
        %v2256 = vunpack.c.h.b16 %v2095
        %v2257 = vunpack.c.l.b16 %v2096
        %v2258 = vunpack.c.h.b16 %v2096
        %v2259 = vunpack.c.l.b16 %v2097
        %v2260 = vunpack.c.h.b16 %v2097
        %v2261 = vunpack.c.l.b16 %v2098
        %v2262 = vunpack.c.h.b16 %v2098
        %v2263 = vunpack.c.l.b16 %v2099
        %v2264 = vunpack.c.h.b16 %v2099
        %v2265 = vunpack.c.l.b16 %v2100
        %v2266 = vunpack.c.h.b16 %v2100
        %v2267 = vunpack.c.l.b16 %v2101
        %v2268 = vunpack.c.h.b16 %v2101
        %v2269 = vunpack.c.l.b16 %v2102
        %v2270 = vunpack.c.h.b16 %v2102
        %v2271 = vunpack.c.l.b16 %v2103
        %v2272 = vunpack.c.h.b16 %v2103
        %v2273 = vunpack.c.l.b16 %v2104
        %v2274 = vunpack.c.h.b16 %v2104
        %v2275 = vunpack.c.l.b16 %v2105
        %v2276 = vunpack.c.h.b16 %v2105
        %v2277 = vunpack.c.l.b16 %v2106
        %v2278 = vunpack.c.h.b16 %v2106
        %v2279 = vunpack.c.l.b16 %v2107
        %v2280 = vunpack.c.h.b16 %v2107
        %v2281 = vunpack.c.l.b16 %v2108
        %v2282 = vunpack.c.h.b16 %v2108
        %v2283 = vunpack.c.l.b16 %v2109
        %v2284 = vunpack.c.h.b16 %v2109
        %v2285 = vunpack.c.l.b16 %v2110
        %v2286 = vunpack.c.h.b16 %v2110
        %v2287 = vunpack.c.l.b16 %v2111
        %v2288 = vunpack.c.h.b16 %v2111
        %v2289 = vunpack.c.l.b16 %v2112
        %v2290 = vunpack.c.h.b16 %v2112
        %v2291 = vunpack.c.l.b16 %v2113
        %v2292 = vunpack.c.h.b16 %v2113
        %v2293 = vunpack.c.l.b16 %v2114
        %v2294 = vunpack.c.h.b16 %v2114
        %v2295 = vunpack.c.l.b16 %v2115
        %v2296 = vunpack.c.h.b16 %v2115
        %v2297 = vunpack.c.l.b16 %v2116
        %v2298 = vunpack.c.h.b16 %v2116
        %v2299 = vunpack.c.l.b16 %v2117
        %v2300 = vunpack.c.h.b16 %v2117
        %v2301 = vunpack.c.l.b16 %v2118
        %v2302 = vunpack.c.h.b16 %v2118
        %v2303 = vunpack.c.l.b16 %v2119
        %v2304 = vunpack.c.h.b16 %v2119
        %v2305 = vunpack.c.l.b16 %v2120
        %v2306 = vunpack.c.h.b16 %v2120
        %v2307 = vunpack.c.l.b16 %v2121
        %v2308 = vunpack.c.h.b16 %v2121
        %v2309 = vunpack.c.l.b16 %v2122
        %v2310 = vunpack.c.h.b16 %v2122
        %v2311 = vunpack.c.l.b16 %v2123
        %v2312 = vunpack.c.h.b16 %v2123
        %v2313 = vunpack.c.l.b16 %v2124
        %v2314 = vunpack.c.h.b16 %v2124
        %v2315 = vunpack.c.l.b16 %v2125
        %v2316 = vunpack.c.h.b16 %v2125
        %v2317 = vunpack.c.l.b16 %v2126
        %v2318 = vunpack.c.h.b16 %v2126
        %v2319 = vunpack.c.l.b16 %v2127
        %v2320 = vunpack.c.h.b16 %v2127
        %v2321 = vunpack.c.l.b16 %v2128
        %v2322 = vunpack.c.h.b16 %v2128
        %v2323 = vunpack.c.l.b16 %v2129
        %v2324 = vunpack.c.h.b16 %v2129
        %v2325 = vunpack.c.l.b16 %v2130
        %v2326 = vunpack.c.h.b16 %v2130
        %v2327 = vunpack.c.l.b16 %v2131
        %v2328 = vunpack.c.h.b16 %v2131
        %v2329 = vunpack.c.l.b16 %v2132
        %v2330 = vunpack.c.h.b16 %v2132
        %v2331 = vunpack.c.l.b16 %v2133
        %v2332 = vunpack.c.h.b16 %v2133
        %v2333 = vunpack.c.l.b16 %v2134
        %v2334 = vunpack.c.h.b16 %v2134
        %v2335 = vunpack.c.l.b16 %v2135
        %v2336 = vunpack.c.h.b16 %v2135
        %v2337 = vunpack.c.l.b16 %v2136
        %v2338 = vunpack.c.h.b16 %v2136
        %v2339 = vunpack.c.l.b16 %v2137
        %v2340 = vunpack.c.h.b16 %v2137
        %v2341 = vunpack.c.l.b16 %v2138
        %v2342 = vunpack.c.h.b16 %v2138
        %v2343 = vpack.c.b16 %v2217, %v2215
        %v2344 = vpack.c.b16 %v2218, %v2216
        %v2345 = vpack.c.b16 %v2221, %v2219
        %v2346 = vpack.c.b16 %v2222, %v2220
        %v2347 = vpack.c.b16 %v2225, %v2223
        %v2348 = vpack.c.b16 %v2226, %v2224
        %v2349 = vpack.c.b16 %v2229, %v2227
        %v2350 = vpack.c.b16 %v2230, %v2228
        %v2351 = vpack.c.b16 %v2233, %v2231
        %v2352 = vpack.c.b16 %v2234, %v2232
        %v2353 = vpack.c.b16 %v2237, %v2235
        %v2354 = vpack.c.b16 %v2238, %v2236
        %v2355 = vpack.c.b16 %v2241, %v2239
        %v2356 = vpack.c.b16 %v2242, %v2240
        %v2357 = vpack.c.b16 %v2245, %v2243
        %v2358 = vpack.c.b16 %v2246, %v2244
        %v2359 = vpack.c.b16 %v2249, %v2247
        %v2360 = vpack.c.b16 %v2250, %v2248
        %v2361 = vpack.c.b16 %v2253, %v2251
        %v2362 = vpack.c.b16 %v2254, %v2252
        %v2363 = vpack.c.b16 %v2257, %v2255
        %v2364 = vpack.c.b16 %v2258, %v2256
        %v2365 = vpack.c.b16 %v2261, %v2259
        %v2366 = vpack.c.b16 %v2262, %v2260
        %v2367 = vpack.c.b16 %v2265, %v2263
        %v2368 = vpack.c.b16 %v2266, %v2264
        %v2369 = vpack.c.b16 %v2269, %v2267
        %v2370 = vpack.c.b16 %v2270, %v2268
        %v2371 = vpack.c.b16 %v2273, %v2271
        %v2372 = vpack.c.b16 %v2274, %v2272
        %v2373 = vpack.c.b16 %v2277, %v2275
        %v2374 = vpack.c.b16 %v2278, %v2276
        %v2375 = vpack.c.b16 %v2281, %v2279
        %v2376 = vpack.c.b16 %v2282, %v2280
        %v2377 = vpack.c.b16 %v2285, %v2283
        %v2378 = vpack.c.b16 %v2286, %v2284
        %v2379 = vpack.c.b16 %v2289, %v2287
        %v2380 = vpack.c.b16 %v2290, %v2288
        %v2381 = vpack.c.b16 %v2293, %v2291
        %v2382 = vpack.c.b16 %v2294, %v2292
        %v2383 = vpack.c.b16 %v2297, %v2295
        %v2384 = vpack.c.b16 %v2298, %v2296
        %v2385 = vpack.c.b16 %v2301, %v2299
        %v2386 = vpack.c.b16 %v2302, %v2300
        %v2387 = vpack.c.b16 %v2305, %v2303
        %v2388 = vpack.c.b16 %v2306, %v2304
        %v2389 = vpack.c.b16 %v2309, %v2307
        %v2390 = vpack.c.b16 %v2310, %v2308
        %v2391 = vpack.c.b16 %v2313, %v2311
        %v2392 = vpack.c.b16 %v2314, %v2312
        %v2393 = vpack.c.b16 %v2317, %v2315
        %v2394 = vpack.c.b16 %v2318, %v2316
        %v2395 = vpack.c.b16 %v2321, %v2319
        %v2396 = vpack.c.b16 %v2322, %v2320
        %v2397 = vpack.c.b16 %v2325, %v2323
        %v2398 = vpack.c.b16 %v2326, %v2324
        %v2399 = vpack.c.b16 %v2329, %v2327
        %v2400 = vpack.c.b16 %v2330, %v2328
        %v2401 = vpack.c.b16 %v2333, %v2331
        %v2402 = vpack.c.b16 %v2334, %v2332
        %v2403 = vpack.c.b16 %v2337, %v2335
        %v2404 = vpack.c.b16 %v2338, %v2336
        %v2405 = vpack.c.b16 %v2341, %v2339
        %v2406 = vpack.c.b16 %v2342, %v2340
        %2471 = vmatprep.subr.bf16.mxu0 %v2344
        %2472 = vmatpush1.bf16.msra.mxu0 %v2343
        %2473 = vmatprep.subr.bf16.mxu0 %v2346
        %2474 = vmatpush1.bf16.msra.mxu0 %v2345
        %2475 = vmatprep.subr.bf16.mxu0 %v2348
        %2476 = vmatpush1.bf16.msra.mxu0 %v2347
        %2477 = vmatprep.subr.bf16.mxu0 %v2350
        %2478 = vmatpush1.bf16.msra.mxu0 %v2349
        %2479 = vmatprep.subr.bf16.mxu0 %v2352
        %2480 = vmatpush1.bf16.msra.mxu0 %v2351
        %2481 = vmatprep.subr.bf16.mxu0 %v2354
        %2482 = vmatpush1.bf16.msra.mxu0 %v2353
        %2483 = vmatprep.subr.bf16.mxu0 %v2356
        %2484 = vmatpush1.bf16.msra.mxu0 %v2355
        %2485 = vmatprep.subr.bf16.mxu0 %v2358
        %2486 = vmatpush1.bf16.msra.mxu0 %v2357
        %2487 = vmatprep.subr.bf16.mxu0 %v2360
        %2488 = vmatpush1.bf16.msra.mxu0 %v2359
        %2489 = vmatprep.subr.bf16.mxu0 %v2362
        %2490 = vmatpush1.bf16.msra.mxu0 %v2361
        %2491 = vmatprep.subr.bf16.mxu0 %v2364
        %2492 = vmatpush1.bf16.msra.mxu0 %v2363
        %2493 = vmatprep.subr.bf16.mxu0 %v2366
        %2494 = vmatpush1.bf16.msra.mxu0 %v2365
        %2495 = vmatprep.subr.bf16.mxu0 %v2368
        %2496 = vmatpush1.bf16.msra.mxu0 %v2367
        %2497 = vmatprep.subr.bf16.mxu0 %v2370
        %2498 = vmatpush1.bf16.msra.mxu0 %v2369
        %2499 = vmatprep.subr.bf16.mxu0 %v2372
        %2500 = vmatpush1.bf16.msra.mxu0 %v2371
        %2501 = vmatprep.subr.bf16.mxu0 %v2374
        %2502 = vmatpush1.bf16.msra.mxu0 %v2373
        %2503 = vmatprep.mubr.bf16.mxu0 %v2072
        %2504 = vmatmul.mubr.bf16.gmra.mrb[0].mxu0 %v2071
        %v2505 = vpop.f32.mrb[0].mxu0
        %v2506 = vadd.f32 %v2144, %v2505
        %v2507 = vpop.f32.mrb[0].mxu0
        %v2508 = vadd.f32 %v2148, %v2507
        %v2509 = vpop.f32.mrb[0].mxu0
        %v2510 = vadd.f32 %v2144, %v2509
        %v2511 = vpop.f32.mrb[0].mxu0
        %v2512 = vadd.f32 %v2148, %v2511
        %2513 = vdwg.mxu0
        %2514 = vmatprep.subr.bf16.mxu0 %v2376
        %2515 = vmatpush1.bf16.msra.mxu0 %v2375
        %2516 = vmatprep.subr.bf16.mxu0 %v2378
        %2517 = vmatpush1.bf16.msra.mxu0 %v2377
        %2518 = vmatprep.subr.bf16.mxu0 %v2380
        %2519 = vmatpush1.bf16.msra.mxu0 %v2379
        %2520 = vmatprep.subr.bf16.mxu0 %v2382
        %2521 = vmatpush1.bf16.msra.mxu0 %v2381
        %2522 = vmatprep.subr.bf16.mxu0 %v2384
        %2523 = vmatpush1.bf16.msra.mxu0 %v2383
        %2524 = vmatprep.subr.bf16.mxu0 %v2386
        %2525 = vmatpush1.bf16.msra.mxu0 %v2385
        %2526 = vmatprep.subr.bf16.mxu0 %v2388
        %2527 = vmatpush1.bf16.msra.mxu0 %v2387
        %2528 = vmatprep.subr.bf16.mxu0 %v2390
        %2529 = vmatpush1.bf16.msra.mxu0 %v2389
        %2530 = vmatprep.subr.bf16.mxu0 %v2392
        %2531 = vmatpush1.bf16.msra.mxu0 %v2391
        %2532 = vmatprep.subr.bf16.mxu0 %v2394
        %2533 = vmatpush1.bf16.msra.mxu0 %v2393
        %2534 = vmatprep.subr.bf16.mxu0 %v2396
        %2535 = vmatpush1.bf16.msra.mxu0 %v2395
        %2536 = vmatprep.subr.bf16.mxu0 %v2398
        %2537 = vmatpush1.bf16.msra.mxu0 %v2397
        %2538 = vmatprep.subr.bf16.mxu0 %v2400
        %2539 = vmatpush1.bf16.msra.mxu0 %v2399
        %2540 = vmatprep.subr.bf16.mxu0 %v2402
        %2541 = vmatpush1.bf16.msra.mxu0 %v2401
        %2542 = vmatprep.subr.bf16.mxu0 %v2404
        %2543 = vmatpush1.bf16.msra.mxu0 %v2403
        %2544 = vmatprep.subr.bf16.mxu0 %v2406
        %2545 = vmatpush1.bf16.msra.mxu0 %v2405
        %2546 = vmatprep.mubr.bf16.mxu0 %v2074
        %2547 = vmatmul.mubr.bf16.gmra.mrb[0].mxu0 %v2073
        %v2548 = vpop.f32.mrb[0].mxu0
        %v2549 = vadd.f32 %v2506, %v2548
        %v2550 = vpop.f32.mrb[0].mxu0
        %v2551 = vadd.f32 %v2508, %v2550
        %v2552 = vpop.f32.mrb[0].mxu0
        %v2553 = vadd.f32 %v2510, %v2552
        %v2554 = vpop.f32.mrb[0].mxu0
        %v2555 = vadd.f32 %v2512, %v2554
        %2556 = vdwg.mxu0
        %v2557 = vmul.f32 %v2549, %v2549
        %v2558 = vmul.f32 %v2551, %v2551
        %v2559 = vmul.f32 %v2553, %v2553
        %v2560 = vmul.f32 %v2555, %v2555
        %v2561 = vadd.f32 %v2557, %v2558
        %2562 = vadd.xlane.f32.xlu0 %v2561
        %v2563 = vpop.xlane.xlu0 %2562
        %v2564 = vadd.f32 %v2559, %v2560
        %2565 = vadd.xlane.f32.xlu0 %v2564
        %v2566 = vpop.xlane.xlu0 %2565
        %v2567 = vmax.f32 %v2563, 1e-24
        %v2568 = vmax.f32 %v2566, 1e-24
        %v2569 = vrsqrt.pop %v2567
        %v2570 = vrsqrt.pop %v2568
        %v2571 = vmul.f32 %v2549, %v2569
        %v2572 = vmul.f32 %v2551, %v2569
        %v2573 = vmul.f32 %v2553, %v2570
        %v2574 = vmul.f32 %v2555, %v2570
        %2575 = vst [vmem:[%s451] sm:$0xff] %v2571
        %2576 = vst [vmem:[%s451 + $0x8] sm:$0xff] %v2572
        %2577 = vst [vmem:[%s451 + $0x10] sm:$0xff] %v2573
        %2578 = vst [vmem:[%s451 + $0x18] sm:$0xff] %v2574
        %v2579 = vmul.f32 %v463, %v463
        %v2580 = vmul.f32 %v464, %v464
        %v2581 = vmul.f32 %v465, %v465
        %v2582 = vmul.f32 %v466, %v466
        %v2583 = vadd.f32 %v2579, %v2580
        %2584 = vadd.xlane.f32.xlu0 %v2583
        %v2585 = vpop.xlane.xlu0 %2584
        %v2586 = vadd.f32 %v2581, %v2582
        %2587 = vadd.xlane.f32.xlu0 %v2586
        %v2588 = vpop.xlane.xlu0 %2587
        %v2589 = vmax.f32 %v2585, 1e-24
        %v2590 = vmax.f32 %v2588, 1e-24
        %v2591 = vrsqrt.pop %v2589
        %v2592 = vrsqrt.pop %v2590
        %v2593 = vmul.f32 %v463, %v2591
        %v2594 = vmul.f32 %v464, %v2591
        %v2595 = vmul.f32 %v465, %v2592
        %v2596 = vmul.f32 %v466, %v2592
        %v2597 = vpack.c.bf16 %v2595, %v2593
        %v2598 = vpack.c.bf16 %v2596, %v2594
        %v2599 = vld [vmem:[#allocation14] sm:$0xf]
        %v2600 = vld [vmem:[#allocation14 + $0x4] sm:$0xf]
        %v2601 = vld [vmem:[#allocation14 + $0x8] sm:$0xf]
        %v2602 = vld [vmem:[#allocation14 + $0xc] sm:$0xf]
        %v2603 = vld [vmem:[#allocation14 + $0x10] sm:$0xf]
        %v2604 = vld [vmem:[#allocation14 + $0x14] sm:$0xf]
        %v2605 = vld [vmem:[#allocation14 + $0x18] sm:$0xf]
        %v2606 = vld [vmem:[#allocation14 + $0x1c] sm:$0xf]
        %v2607 = vld [vmem:[#allocation14 + $0x20] sm:$0xf]
        %v2608 = vld [vmem:[#allocation14 + $0x24] sm:$0xf]
        %v2609 = vld [vmem:[#allocation14 + $0x28] sm:$0xf]
        %v2610 = vld [vmem:[#allocation14 + $0x2c] sm:$0xf]
        %v2611 = vld [vmem:[#allocation14 + $0x30] sm:$0xf]
        %v2612 = vld [vmem:[#allocation14 + $0x34] sm:$0xf]
        %v2613 = vld [vmem:[#allocation14 + $0x38] sm:$0xf]
        %v2614 = vld [vmem:[#allocation14 + $0x3c] sm:$0xf]
        %v2615 = vld [vmem:[#allocation14 + $0x40] sm:$0xf]
        %v2616 = vld [vmem:[#allocation14 + $0x44] sm:$0xf]
        %v2617 = vld [vmem:[#allocation14 + $0x48] sm:$0xf]
        %v2618 = vld [vmem:[#allocation14 + $0x4c] sm:$0xf]
        %v2619 = vld [vmem:[#allocation14 + $0x50] sm:$0xf]
        %v2620 = vld [vmem:[#allocation14 + $0x54] sm:$0xf]
        %v2621 = vld [vmem:[#allocation14 + $0x58] sm:$0xf]
        %v2622 = vld [vmem:[#allocation14 + $0x5c] sm:$0xf]
        %v2623 = vld [vmem:[#allocation14 + $0x60] sm:$0xf]
        %v2624 = vld [vmem:[#allocation14 + $0x64] sm:$0xf]
        %v2625 = vld [vmem:[#allocation14 + $0x68] sm:$0xf]
        %v2626 = vld [vmem:[#allocation14 + $0x6c] sm:$0xf]
        %v2627 = vld [vmem:[#allocation14 + $0x70] sm:$0xf]
        %v2628 = vld [vmem:[#allocation14 + $0x74] sm:$0xf]
        %v2629 = vld [vmem:[#allocation14 + $0x78] sm:$0xf]
        %v2630 = vld [vmem:[#allocation14 + $0x7c] sm:$0xf]
        %v2663 = vunpack.c.l.b16 %v2599
        %v2664 = vunpack.c.l.b16 %v2600
        %v2665 = vunpack.c.l.b16 %v2601
        %v2666 = vunpack.c.l.b16 %v2602
        %v2667 = vunpack.c.l.b16 %v2603
        %v2668 = vunpack.c.l.b16 %v2604
        %v2669 = vunpack.c.l.b16 %v2605
        %v2670 = vunpack.c.l.b16 %v2606
        %v2671 = vunpack.c.l.b16 %v2607
        %v2672 = vunpack.c.l.b16 %v2608
        %v2673 = vunpack.c.l.b16 %v2609
        %v2674 = vunpack.c.l.b16 %v2610
        %v2675 = vunpack.c.l.b16 %v2611
        %v2676 = vunpack.c.l.b16 %v2612
        %v2677 = vunpack.c.l.b16 %v2613
        %v2678 = vunpack.c.l.b16 %v2614
        %v2679 = vunpack.c.l.b16 %v2615
        %v2680 = vunpack.c.l.b16 %v2616
        %v2681 = vunpack.c.l.b16 %v2617
        %v2682 = vunpack.c.l.b16 %v2618
        %v2683 = vunpack.c.l.b16 %v2619
        %v2684 = vunpack.c.l.b16 %v2620
        %v2685 = vunpack.c.l.b16 %v2621
        %v2686 = vunpack.c.l.b16 %v2622
        %v2687 = vunpack.c.l.b16 %v2623
        %v2688 = vunpack.c.l.b16 %v2624
        %v2689 = vunpack.c.l.b16 %v2625
        %v2690 = vunpack.c.l.b16 %v2626
        %v2691 = vunpack.c.l.b16 %v2627
        %v2692 = vunpack.c.l.b16 %v2628
        %v2693 = vunpack.c.l.b16 %v2629
        %v2694 = vunpack.c.l.b16 %v2630
        %v2695 = vpack.c.b16 %v2664, %v2663
        %v2696 = vpack.c.b16 %v2666, %v2665
        %v2697 = vpack.c.b16 %v2668, %v2667
        %v2698 = vpack.c.b16 %v2670, %v2669
        %v2699 = vpack.c.b16 %v2672, %v2671
        %v2700 = vpack.c.b16 %v2674, %v2673
        %v2701 = vpack.c.b16 %v2676, %v2675
        %v2702 = vpack.c.b16 %v2678, %v2677
        %v2703 = vpack.c.b16 %v2680, %v2679
        %v2704 = vpack.c.b16 %v2682, %v2681
        %v2705 = vpack.c.b16 %v2684, %v2683
        %v2706 = vpack.c.b16 %v2686, %v2685
        %v2707 = vpack.c.b16 %v2688, %v2687
        %v2708 = vpack.c.b16 %v2690, %v2689
        %v2709 = vpack.c.b16 %v2692, %v2691
        %v2710 = vpack.c.b16 %v2694, %v2693
        %2727 = vmatprep.subr.bf16.mxu0 0
        %2728 = vmatpush1.bf16.msra.mxu0 %v2695
        %2729 = vmatprep.subr.bf16.mxu0 0
        %2730 = vmatpush1.bf16.msra.mxu0 %v2696
        %2731 = vmatprep.subr.bf16.mxu0 0
        %2732 = vmatpush1.bf16.msra.mxu0 %v2697
        %2733 = vmatprep.subr.bf16.mxu0 0
        %2734 = vmatpush1.bf16.msra.mxu0 %v2698
        %2735 = vmatprep.subr.bf16.mxu0 0
        %2736 = vmatpush1.bf16.msra.mxu0 %v2699
        %2737 = vmatprep.subr.bf16.mxu0 0
        %2738 = vmatpush1.bf16.msra.mxu0 %v2700
        %2739 = vmatprep.subr.bf16.mxu0 0
        %2740 = vmatpush1.bf16.msra.mxu0 %v2701
        %2741 = vmatprep.subr.bf16.mxu0 0
        %2742 = vmatpush1.bf16.msra.mxu0 %v2702
        %2743 = vmatprep.subr.bf16.mxu0 0
        %2744 = vmatpush1.bf16.msra.mxu0 %v2703
        %2745 = vmatprep.subr.bf16.mxu0 0
        %2746 = vmatpush1.bf16.msra.mxu0 %v2704
        %2747 = vmatprep.subr.bf16.mxu0 0
        %2748 = vmatpush1.bf16.msra.mxu0 %v2705
        %2749 = vmatprep.subr.bf16.mxu0 0
        %2750 = vmatpush1.bf16.msra.mxu0 %v2706
        %2751 = vmatprep.subr.bf16.mxu0 0
        %2752 = vmatpush1.bf16.msra.mxu0 %v2707
        %2753 = vmatprep.subr.bf16.mxu0 0
        %2754 = vmatpush1.bf16.msra.mxu0 %v2708
        %2755 = vmatprep.subr.bf16.mxu0 0
        %2756 = vmatpush1.bf16.msra.mxu0 %v2709
        %2757 = vmatprep.subr.bf16.mxu0 0
        %2758 = vmatpush1.bf16.msra.mxu0 %v2710
        %2759 = vmatprep.mubr.bf16.mxu0 %v2598
        %2760 = vmatmul.mubr.bf16.gmra.mrb[0].mxu0 %v2597
        %v2761 = vpop.f32.mrb[0].mxu0
        %v2762 = vadd.f32 0.0, %v2761
        %v2763 = vpop.f32.mrb[0].mxu0
        %v2764 = vpop.f32.mrb[0].mxu0
        %v2765 = vadd.f32 0.0, %v2764
        %v2766 = vpop.f32.mrb[0].mxu0
        %2767 = vdwg.mxu0
        %2768 = vst [vmem:[%s458] sm:$0xff] %v2762
        %2769 = vst [vmem:[%s458 + $0x8] sm:$0xff] %v2765
        %s2770 = sand.u32 %s215, 1
        %s2771 = scalar_lea.sflag [#allocation4], %s2770
        %s2772 = sand.u32 %s215, 1
        %s2773 = smul.addr %s2772, 32
        %s2774 = scalar_lea.vmem [#allocation16], %s2773
        %s2775 = sand.u32 %s241, 1
        %s2776 = scalar_lea.sflag [#allocation18], %s2775
        %s2777 = sand.u32 %s241, 1
        %s2778 = smul.addr %s2777, 16
        %s2779 = scalar_lea.vmem [#allocation17], %s2778
        // Predicated region
        $region85: #{tpu_custom_call.1} parent=51 // pred_check
          %p2780 = pneg %p225
        $region86: #{tpu_custom_call.1} parent=51 // pred_check_branch
          %2782 = sbr.rel (%p2780) target = $region88
        $region87: #{tpu_custom_call.1} parent=51 // pred_region
          %s2783 = smul.u32 2, %s34
          %s2785 = ssub.s32 512, 512
          %2786 = vsyncadd %s2771, %s2785
          %s2787 = smul.addr %s2783, 2
          %s2788 = smul.addr %s2787, 128
          %s2789 = scalar_lea.hbm %s8, %s2788
          %s2790 = sshll.u32 %s2774, 4
          %s2791 = int_to_ptr.vmem [resolvable:$true] %s2790
          %2796 = dma.vmem_to_hbm [thread:$0]  %s2791, 512, %s2789, %s2771, 256, 256, 16
        $region88: #{tpu_custom_call.1} parent=51 // pred_fallthru
          _
        // Predicated region
        $region89: #{tpu_custom_call.1} parent=51 // pred_check
          %p2797 = pneg %p251
        $region90: #{tpu_custom_call.1} parent=51 // pred_check_branch
          %2799 = sbr.rel (%p2797) target = $region92
        $region91: #{tpu_custom_call.1} parent=51 // pred_region
          %s2800 = smul.u32 2, %s34
          %s2802 = ssub.s32 256, 256
          %2803 = vsyncadd %s2776, %s2802
          %s2804 = smul.addr %s2800, 128
          %s2805 = scalar_lea.hbm %s9, %s2804
          %s2806 = sshll.u32 %s2779, 4
          %s2807 = int_to_ptr.vmem [resolvable:$true] %s2806
          %2812 = dma.vmem_to_hbm [thread:$0]  %s2807, 256, %s2805, %s2776, 128, 128, 8
        $region92: #{tpu_custom_call.1} parent=51 // pred_fallthru
          _
      $region52: #{tpu_custom_call.1} parent=5 // pred_fallthru
        _
      %p2813 = scmp.le.s32.totalorder 2, %s29
      // Predicated region
      $region93: #{tpu_custom_call.1} parent=5 // pred_check
        %p2814 = pneg %p2813
      $region94: #{tpu_custom_call.1} parent=5 // pred_check_branch
        %2816 = sbr.rel (%p2814) target = $region96
      $region95: #{tpu_custom_call.1} parent=5 // pred_region
        %s2817 = ssub.s32 %s29, 2
        // Predicated region
        $region97: #{tpu_custom_call.1} parent=95 // pred_check
          %p2818 = pneg %p231
        $region98: #{tpu_custom_call.1} parent=95 // pred_check_branch
          %2820 = sbr.rel (%p2818) target = $region100
        $region99: #{tpu_custom_call.1} parent=95 // pred_region
          %s2821 = sand.u32 %s216, 1
          %s2822 = scalar_lea.sflag [#allocation4], %s2821
          %s2823 = sand.u32 %s216, 1
          %s2824 = smul.addr %s2823, 32
          %s2825 = scalar_lea.vmem [#allocation16], %s2824
          %2826 = dma.done %s2822, 512
        $region100: #{tpu_custom_call.1} parent=95 // pred_fallthru
          _
        // Predicated region
        $region101: #{tpu_custom_call.1} parent=95 // pred_check
          %p2827 = pneg %p257
        $region102: #{tpu_custom_call.1} parent=95 // pred_check_branch
          %2829 = sbr.rel (%p2827) target = $region104
        $region103: #{tpu_custom_call.1} parent=95 // pred_region
          %s2830 = sand.u32 %s242, 1
          %s2831 = scalar_lea.sflag [#allocation18], %s2830
          %s2832 = sand.u32 %s242, 1
          %s2833 = smul.addr %s2832, 16
          %s2834 = scalar_lea.vmem [#allocation17], %s2833
          %2835 = dma.done %s2831, 256
        $region104: #{tpu_custom_call.1} parent=95 // pred_fallthru
          _
      $region96: #{tpu_custom_call.1} parent=5 // pred_fallthru
        _
    $region6: #{tpu_custom_call.1} parent=1 // loop_footer
      %s33 = sadd.s32 1, %s29
    $region7: #{tpu_custom_call.1} parent=1 // loop_footer_branch
      %28 = sbr.rel target = $region3
    $region8: #{tpu_custom_call.1} parent=1 // loop_exit
      _
    %2836 = vsyncpa [#allocation3], 1
    %s2837 = scalar_lea.sflag [#allocation3], 1
    %2838 = vsyncpa %s2837, 1
    %2839 = vsyncpa [#allocation6], 1
    %2840 = vsyncpa [#allocation9], 1
    %2841 = vsyncpa [#allocation12], 1
    %2842 = vsyncpa [#allocation15], 1
    %2843 = vsyncpa [#allocation4], 1
    %s2844 = scalar_lea.sflag [#allocation4], 1
    %2845 = vsyncpa %s2844, 1
    %2846 = vsyncpa [#allocation18], 1
    %s2847 = scalar_lea.sflag [#allocation18], 1
    %2848 = vsyncpa %s2847, 1

</llo_original>
